<compile_context>
chip_gen: v7x
topology: tpu7x:2x2x1
jax: 0.10.0
libtpu: 0.0.40
codegen_flags: <defaults>
</compile_context>

<pallas_src>
import jax
import jax.numpy as jnp
from jax.experimental import pallas as pl
from jax.experimental.pallas import tpu as pltpu


def _round_up(x, m):
    return (x + m - 1) // m * m


def _lstm_chunk_kernel(x_ref, wih_ref, whh_ref, b_ref, out_ref,
                       h_scr, c_scr, xg_scr):
    """One (batch-block, time-chunk) grid step of a single-layer LSTM.

    x_ref   : (Tc, Bb, D)     time-major input chunk (mxu dtype)
    wih_ref : (D, 4*Hp)       W_ih^T, gate-padded (mxu dtype)
    whh_ref : (Hp, 4*Hp)      W_hh^T, gate-padded (mxu dtype)
    b_ref   : (1, 4*Hp)       b_ih + b_hh, gate-padded (f32)
    out_ref : (Tc, Bb, Hp)    hidden states for the chunk (f32)
    h_scr/c_scr : (Bb, Hp)    f32 carries across time chunks
    xg_scr  : (Tc, Bb, 4*Hp)  f32 precomputed input projection
    """
    Tc, Bb, D = x_ref.shape
    Hp = out_ref.shape[-1]

    # Reset the recurrent state at the first time chunk of every batch block.
    @pl.when(pl.program_id(1) == 0)
    def _():
        h_scr[...] = jnp.zeros_like(h_scr)
        c_scr[...] = jnp.zeros_like(c_scr)

    # Phase 1: input projection hoisted out of the recurrence.
    # One large MXU matmul over Tc*Bb rows; bias folded in once per chunk.
    x2d = x_ref[...].reshape(Tc * Bb, D)
    xg = jnp.dot(x2d, wih_ref[...], preferred_element_type=jnp.float32)
    xg = xg + b_ref[...]
    xg_scr[...] = xg.reshape(Tc, Bb, 4 * Hp)

    whh_t = whh_ref[...]
    mxu_dtype = whh_t.dtype

    # Phase 2: serial recurrence. Only the (Bb, Hp) x (Hp, 4Hp) recurrent
    # matmul + gate elementwise per step. Gate slices are 128-lane aligned
    # (Hp is a multiple of 128); per-step stores are dense (Bb, Hp) tiles.
    def step(i, carry):
        h, c = carry
        g = xg_scr[i] + jnp.dot(h.astype(mxu_dtype), whh_t,
                                preferred_element_type=jnp.float32)
        i_g = jax.nn.sigmoid(g[:, 0 * Hp:1 * Hp])
        f_g = jax.nn.sigmoid(g[:, 1 * Hp:2 * Hp])
        g_g = jnp.tanh(g[:, 2 * Hp:3 * Hp])
        o_g = jax.nn.sigmoid(g[:, 3 * Hp:4 * Hp])
        c_new = f_g * c + i_g * g_g
        h_new = o_g * jnp.tanh(c_new)
        out_ref[i] = h_new.astype(out_ref.dtype)
        return h_new, c_new

    h, c = jax.lax.fori_loop(0, Tc, step, (h_scr[...], c_scr[...]),
                             unroll=min(Tc, 8))
    h_scr[...] = h
    c_scr[...] = c


def _pad_gate_cols(w, H, Hp):
    """Pad each of the 4 PyTorch gate blocks (i, f, g, o) from H to Hp cols."""
    lead = w.shape[:-1]
    w4 = w.reshape(*lead, 4, H)
    pad = [(0, 0)] * len(lead) + [(0, 0), (0, Hp - H)]
    return jnp.pad(w4, pad).reshape(*lead, 4 * Hp)


def _vmem_estimate(Tc, Bb, D, Hp, x_bytes):
    """Upper-bound working-set bytes for one kernel instance."""
    return (2 * Tc * Bb * D * x_bytes            # input blocks (double buffered)
            + 2 * Tc * Bb * Hp * 4               # output blocks (double buffered)
            + 2 * ((D + Hp) * 4 * Hp * x_bytes   # weights (conservative x2)
                   + 4 * Hp * 4)                 # bias
            + 2 * Bb * Hp * 4                    # h/c carries
            + Tc * Bb * 4 * Hp * 4)              # xg scratch


def encoder_forward(tokens, embedding, w_ih, w_hh, b_ih, b_hh, *,
                    mxu_dtype=jnp.bfloat16, time_chunk=None):
    """Encoder.forward for mode='text', rnn='lstm', nlayers=1, dropout_p=0."""
    B, L = tokens.shape
    D = embedding.shape[1]
    H = w_hh.shape[1]
    x_bytes = jnp.dtype(mxu_dtype).itemsize

    Hp = _round_up(H, 128)                      # lane-aligned hidden / gates
    Bb = min(_round_up(B, 8), 64)               # rows per kernel instance
    Bp = _round_up(B, Bb)
    NB = Bp // Bb

    # Time steps per grid chunk: as large as fits a conservative VMEM budget
    # (keeps headroom on v7x's 64 MiB VMEM per TensorCore).
    if time_chunk is not None:
        Tc = time_chunk
    else:
        budget = 24 * 2 ** 20
        Tc = max(min(L, 128), 1)
        while Tc > 8 and _vmem_estimate(Tc, Bb, D, Hp, x_bytes) > budget:
            Tc //= 2
    Lp = _round_up(L, Tc)
    NT = Lp // Tc

    # Embedding lookup (plain-JAX glue), pad batch/time, time-major, MXU cast.
    e = jnp.take(embedding, tokens, axis=0)                     # (B, L, D)
    e = jnp.pad(e, ((0, Bp - B), (0, Lp - L), (0, 0)))
    x_tm = jnp.transpose(e, (1, 0, 2)).astype(mxu_dtype)        # (Lp, Bp, D)

    # Gate-padded, transposed parameters (PyTorch gate order i, f, g, o).
    wih_t = _pad_gate_cols(jnp.transpose(w_ih), H, Hp).astype(mxu_dtype)   # (D, 4Hp)
    whh_t = _pad_gate_cols(jnp.transpose(w_hh), H, Hp)                     # (H, 4Hp)
    whh_t = jnp.pad(whh_t, ((0, Hp - H), (0, 0))).astype(mxu_dtype)        # (Hp, 4Hp)
    bias = _pad_gate_cols((b_ih + b_hh).reshape(1, 4 * H), H, Hp)          # (1, 4Hp)
    bias = bias.astype(jnp.float32)

    est = _vmem_estimate(Tc, Bb, D, Hp, x_bytes)
    vmem_limit = int(min(max(est + 4 * 2 ** 20, 16 * 2 ** 20), 48 * 2 ** 20))

    grid_spec = pltpu.PrefetchScalarGridSpec(
        num_scalar_prefetch=0,
        grid=(NB, NT),
        in_specs=[
            pl.BlockSpec((Tc, Bb, D), lambda b, t: (t, b, 0)),
            pl.BlockSpec((D, 4 * Hp), lambda b, t: (0, 0)),
            pl.BlockSpec((Hp, 4 * Hp), lambda b, t: (0, 0)),
            pl.BlockSpec((1, 4 * Hp), lambda b, t: (0, 0)),
        ],
        out_specs=pl.BlockSpec((Tc, Bb, Hp), lambda b, t: (t, b, 0)),
        scratch_shapes=[
            pltpu.VMEM((Bb, Hp), jnp.float32),           # h carry
            pltpu.VMEM((Bb, Hp), jnp.float32),           # c carry
            pltpu.VMEM((Tc, Bb, 4 * Hp), jnp.float32),   # precomputed gates
        ],
    )

    out_tm = pl.pallas_call(
        _lstm_chunk_kernel,
        out_shape=jax.ShapeDtypeStruct((Lp, Bp, Hp), jnp.float32),
        grid_spec=grid_spec,
        compiler_params=pltpu.CompilerParams(
            dimension_semantics=("parallel", "arbitrary"),
            vmem_limit_bytes=vmem_limit),
    )(x_tm, wih_t, whh_t, bias)

    # Strip padding, back to batch-first (one bandwidth-bound XLA pass).
    output = jnp.transpose(out_tm[:L, :B, :H], (1, 0, 2))       # (B, L, H)
    # dropout_p = 0 -> identity; mode='text' -> labels/masks/node_ids are None
    # TODO(synk): variable-length / packed-sequence masking is not modeled
    # (the original Encoder also runs the LSTM over the full padded length).
    return output, None, None, None


def _reference_forward(tokens, embedding, w_ih, w_hh, b_ih, b_hh):
    """Pure-JAX reference (mirrors torch.nn.LSTM, batch_first, 1 layer)."""
    B, L = tokens.shape
    H = w_hh.shape[1]
    e = jnp.take(embedding, tokens, axis=0)
    h = jnp.zeros((B, H), jnp.float32)
    c = jnp.zeros((B, H), jnp.float32)
    outs = []
    for t in range(L):
        gates = e[:, t, :] @ w_ih.T + h @ w_hh.T + b_ih + b_hh
        i_g = jax.nn.sigmoid(gates[:, 0 * H:1 * H])
        f_g = jax.nn.sigmoid(gates[:, 1 * H:2 * H])
        g_g = jnp.tanh(gates[:, 2 * H:3 * H])
        o_g = jax.nn.sigmoid(gates[:, 3 * H:4 * H])
        c = f_g * c + i_g * g_g
        h = o_g * jnp.tanh(c)
        outs.append(h)
    return jnp.stack(outs, axis=1)


if __name__ == "__main__":
    batch = 2
    seq = 8
    vocab = 50
    embed_dim = 32     # embed.output_size == input_size
    hidden = 32        # hidden_size

    key = jax.random.PRNGKey(0)
    k_tok, k_emb, k_wih, k_whh, k_bih, k_bhh = jax.random.split(key, 6)

    tokens = jax.random.randint(k_tok, (batch, seq), 0, vocab, dtype=jnp.int32)
    embedding = jax.random.normal(k_emb, (vocab, embed_dim), jnp.float32) * 0.1

    bound = 1.0 / (hidden ** 0.5)
    w_ih = jax.random.uniform(k_wih, (4 * hidden, embed_dim), jnp.float32, -bound, bound)
    w_hh = jax.random.uniform(k_whh, (4 * hidden, hidden), jnp.float32, -bound, bound)
    b_ih = jax.random.uniform(k_bih, (4 * hidden,), jnp.float32, -bound, bound)
    b_hh = jax.random.uniform(k_bhh, (4 * hidden,), jnp.float32, -bound, bound)

    ref = _reference_forward(tokens, embedding, w_ih, w_hh, b_ih, b_hh)

    # f32 MXU-operand path: tight check against the pure-JAX reference.
    out_f32, labels, labels_mask, label_node_ids = encoder_forward(
        tokens, embedding, w_ih, w_hh, b_ih, b_hh, mxu_dtype=jnp.float32)
    out_f32 = jax.block_until_ready(out_f32)
    assert out_f32.shape == (batch, seq, hidden)
    assert labels is None and labels_mask is None and label_node_ids is None
    assert jnp.allclose(out_f32, ref, atol=1e-4, rtol=1e-4), "f32 mismatch vs reference"

    # bf16 MXU-operand path (default): carries/gates stay f32, looser check.
    out_bf16, _, _, _ = encoder_forward(tokens, embedding, w_ih, w_hh, b_ih, b_hh)
    out_bf16 = jax.block_until_ready(out_bf16)
    assert out_bf16.shape == (batch, seq, hidden)
    assert jnp.allclose(out_bf16, ref, atol=3e-2, rtol=3e-2), "bf16 mismatch vs reference"

    print("KERNEL_OK")
</pallas_src>

<mosaic_0001>
module attributes {stable_mosaic.version = 11 : i64} {
  func.func @_lstm_chunk_kernel(%arg0: i32, %arg1: i32, %arg2: memref<8x8x32xf32, #tpu.memory_space<vmem>>, %arg3: memref<32x512xf32, #tpu.memory_space<vmem>>, %arg4: memref<128x512xf32, #tpu.memory_space<vmem>>, %arg5: memref<1x512xf32, #tpu.memory_space<vmem>>, %arg6: memref<8x8x128xf32, #tpu.memory_space<vmem>>, %arg7: memref<8x128xf32, #tpu.memory_space<vmem>>, %arg8: memref<8x128xf32, #tpu.memory_space<vmem>>, %arg9: memref<8x8x512xf32, #tpu.memory_space<vmem>>) attributes {dimension_semantics = [#tpu.dimension_semantics<parallel>, #tpu.dimension_semantics<arbitrary>], iteration_bounds = array<i64: 1, 1>, scalar_prefetch = 0 : i64, scratch_operands = 3 : i64, tpu.core_type = #tpu.core_type<tc>, window_params = [{transform_indices = @transform_0, window_bounds = array<i64: 8, 8, 32>}, {pipeline_mode = #tpu.pipeline_mode<synchronous>, transform_indices = @transform_1, window_bounds = array<i64: 32, 512>}, {pipeline_mode = #tpu.pipeline_mode<synchronous>, transform_indices = @transform_2, window_bounds = array<i64: 128, 512>}, {pipeline_mode = #tpu.pipeline_mode<synchronous>, transform_indices = @transform_3, window_bounds = array<i64: 1, 512>}, {transform_indices = @transform_4, window_bounds = array<i64: 8, 8, 128>}]} {
    %c0_i32 = arith.constant 0 : i32
    %0 = arith.cmpi eq, %arg1, %c0_i32 : i32
    %1 = arith.extui %0 : i1 to i32
    %c0_i32_0 = arith.constant 0 : i32
    %2 = arith.cmpi ne, %1, %c0_i32_0 : i32
    scf.if %2 {
      %cst_85 = arith.constant 0.000000e+00 : f32
      %289 = vector.broadcast %cst_85 : f32 to vector<8x128xf32>
      %c0_86 = arith.constant 0 : index
      %c0_87 = arith.constant 0 : index
      %290 = vector.load %arg7[%c0_86, %c0_87] : memref<8x128xf32, #tpu.memory_space<vmem>>, vector<8x128xf32>
      tpu.vector_store %arg7[%c0_86, %c0_87], %289 {strides = array<i32>} : memref<8x128xf32, #tpu.memory_space<vmem>>, vector<8x128xf32>,
      %cst_88 = arith.constant 0.000000e+00 : f32
      %291 = vector.broadcast %cst_88 : f32 to vector<8x128xf32>
      %c0_89 = arith.constant 0 : index
      %c0_90 = arith.constant 0 : index
      %292 = vector.load %arg8[%c0_89, %c0_90] : memref<8x128xf32, #tpu.memory_space<vmem>>, vector<8x128xf32>
      tpu.vector_store %arg8[%c0_89, %c0_90], %291 {strides = array<i32>} : memref<8x128xf32, #tpu.memory_space<vmem>>, vector<8x128xf32>,
    } else {
    }
    %c0 = arith.constant 0 : index
    %c0_1 = arith.constant 0 : index
    %c0_2 = arith.constant 0 : index
    %3 = vector.load %arg2[%c0, %c0_1, %c0_2] : memref<8x8x32xf32, #tpu.memory_space<vmem>>, vector<8x8x32xf32>
    %4 = vector.shape_cast %3 : vector<8x8x32xf32> to vector<64x32xf32>
    %c0_3 = arith.constant 0 : index
    %c0_4 = arith.constant 0 : index
    %5 = vector.load %arg3[%c0_3, %c0_4] : memref<32x512xf32, #tpu.memory_space<vmem>>, vector<32x512xf32>
    %cst = arith.constant dense<0.000000e+00> : vector<64x512xf32>
    %6 = tpu.matmul %4, %5, %cst {dimension_numbers = #tpu.dot_dimension_numbers<[1], [0], [0], [1], [0, 0, 1, 1], [], []>} : vector<64x32xf32>, vector<32x512xf32>, vector<64x512xf32> -> vector<64x512xf32>
    %c0_5 = arith.constant 0 : index
    %c0_6 = arith.constant 0 : index
    %7 = vector.load %arg5[%c0_5, %c0_6] : memref<1x512xf32, #tpu.memory_space<vmem>>, vector<1x512xf32>
    %8 = vector.broadcast %7 : vector<1x512xf32> to vector<64x512xf32>
    %9 = arith.addf %6, %8 : vector<64x512xf32>
    %10 = vector.shape_cast %9 : vector<64x512xf32> to vector<8x8x512xf32>
    %c0_7 = arith.constant 0 : index
    %c0_8 = arith.constant 0 : index
    %c0_9 = arith.constant 0 : index
    %11 = vector.load %arg9[%c0_7, %c0_8, %c0_9] : memref<8x8x512xf32, #tpu.memory_space<vmem>>, vector<8x8x512xf32>
    tpu.vector_store %arg9[%c0_7, %c0_8, %c0_9], %10 {strides = array<i32>} : memref<8x8x512xf32, #tpu.memory_space<vmem>>, vector<8x8x512xf32>,
    %c0_10 = arith.constant 0 : index
    %c0_11 = arith.constant 0 : index
    %12 = vector.load %arg4[%c0_10, %c0_11] : memref<128x512xf32, #tpu.memory_space<vmem>>, vector<128x512xf32>
    %c0_12 = arith.constant 0 : index
    %c0_13 = arith.constant 0 : index
    %13 = vector.load %arg7[%c0_12, %c0_13] : memref<8x128xf32, #tpu.memory_space<vmem>>, vector<8x128xf32>
    %c0_14 = arith.constant 0 : index
    %c0_15 = arith.constant 0 : index
    %14 = vector.load %arg8[%c0_14, %c0_15] : memref<8x128xf32, #tpu.memory_space<vmem>>, vector<8x128xf32>
    %c0_i32_16 = arith.constant 0 : i32
    %15 = arith.index_cast %c0_i32_16 : i32 to index
    %c0_17 = arith.constant 0 : index
    %c0_18 = arith.constant 0 : index
    %16 = vector.load %arg9[%15, %c0_17, %c0_18] : memref<8x8x512xf32, #tpu.memory_space<vmem>>, vector<1x8x512xf32>
    %17 = vector.shape_cast %16 : vector<1x8x512xf32> to vector<8x512xf32>
    %cst_19 = arith.constant dense<0.000000e+00> : vector<8x512xf32>
    %18 = tpu.matmul %13, %12, %cst_19 {dimension_numbers = #tpu.dot_dimension_numbers<[1], [0], [0], [1], [0, 0, 1, 1], [], []>} : vector<8x128xf32>, vector<128x512xf32>, vector<8x512xf32> -> vector<8x512xf32>
    %19 = arith.addf %17, %18 : vector<8x512xf32>
    %20 = vector.extract_strided_slice %19 {offsets = [0, 0], sizes = [8, 128], strides = [1, 1]} : vector<8x512xf32> to vector<8x128xf32>
    %21 = arith.negf %20 : vector<8x128xf32>
    %22 = math.exp %21 : vector<8x128xf32>
    %cst_20 = arith.constant 1.000000e+00 : f32
    %23 = vector.broadcast %cst_20 : f32 to vector<8x128xf32>
    %24 = arith.addf %23, %22 : vector<8x128xf32>
    %25 = arith.divf %23, %24 : vector<8x128xf32>
    %26 = vector.extract_strided_slice %19 {offsets = [0, 128], sizes = [8, 128], strides = [1, 1]} : vector<8x512xf32> to vector<8x128xf32>
    %27 = arith.negf %26 : vector<8x128xf32>
    %28 = math.exp %27 : vector<8x128xf32>
    %cst_21 = arith.constant 1.000000e+00 : f32
    %29 = vector.broadcast %cst_21 : f32 to vector<8x128xf32>
    %30 = arith.addf %29, %28 : vector<8x128xf32>
    %31 = arith.divf %29, %30 : vector<8x128xf32>
    %32 = vector.extract_strided_slice %19 {offsets = [0, 256], sizes = [8, 128], strides = [1, 1]} : vector<8x512xf32> to vector<8x128xf32>
    %33 = math.tanh %32 : vector<8x128xf32>
    %34 = vector.extract_strided_slice %19 {offsets = [0, 384], sizes = [8, 128], strides = [1, 1]} : vector<8x512xf32> to vector<8x128xf32>
    %35 = arith.negf %34 : vector<8x128xf32>
    %36 = math.exp %35 : vector<8x128xf32>
    %cst_22 = arith.constant 1.000000e+00 : f32
    %37 = vector.broadcast %cst_22 : f32 to vector<8x128xf32>
    %38 = arith.addf %37, %36 : vector<8x128xf32>
    %39 = arith.divf %37, %38 : vector<8x128xf32>
    %40 = arith.mulf %31, %14 : vector<8x128xf32>
    %41 = arith.mulf %25, %33 : vector<8x128xf32>
    %42 = arith.addf %40, %41 : vector<8x128xf32>
    %43 = math.tanh %42 : vector<8x128xf32>
    %44 = arith.mulf %39, %43 : vector<8x128xf32>
    %45 = arith.index_cast %c0_i32_16 : i32 to index
    %c0_23 = arith.constant 0 : index
    %c0_24 = arith.constant 0 : index
    %46 = vector.load %arg6[%45, %c0_23, %c0_24] : memref<8x8x128xf32, #tpu.memory_space<vmem>>, vector<1x8x128xf32>
    %47 = vector.shape_cast %46 : vector<1x8x128xf32> to vector<8x128xf32>
    %48 = vector.shape_cast %44 : vector<8x128xf32> to vector<1x8x128xf32>
    tpu.vector_store %arg6[%45, %c0_23, %c0_24], %48 {strides = array<i32>} : memref<8x8x128xf32, #tpu.memory_space<vmem>>, vector<1x8x128xf32>,
    %c1_i32 = arith.constant 1 : i32
    %49 = arith.index_cast %c1_i32 : i32 to index
    %c0_25 = arith.constant 0 : index
    %c0_26 = arith.constant 0 : index
    %50 = vector.load %arg9[%49, %c0_25, %c0_26] : memref<8x8x512xf32, #tpu.memory_space<vmem>>, vector<1x8x512xf32>
    %51 = vector.shape_cast %50 : vector<1x8x512xf32> to vector<8x512xf32>
    %cst_27 = arith.constant dense<0.000000e+00> : vector<8x512xf32>
    %52 = tpu.matmul %44, %12, %cst_27 {dimension_numbers = #tpu.dot_dimension_numbers<[1], [0], [0], [1], [0, 0, 1, 1], [], []>} : vector<8x128xf32>, vector<128x512xf32>, vector<8x512xf32> -> vector<8x512xf32>
    %53 = arith.addf %51, %52 : vector<8x512xf32>
    %54 = vector.extract_strided_slice %53 {offsets = [0, 0], sizes = [8, 128], strides = [1, 1]} : vector<8x512xf32> to vector<8x128xf32>
    %55 = arith.negf %54 : vector<8x128xf32>
    %56 = math.exp %55 : vector<8x128xf32>
    %cst_28 = arith.constant 1.000000e+00 : f32
    %57 = vector.broadcast %cst_28 : f32 to vector<8x128xf32>
    %58 = arith.addf %57, %56 : vector<8x128xf32>
    %59 = arith.divf %57, %58 : vector<8x128xf32>
    %60 = vector.extract_strided_slice %53 {offsets = [0, 128], sizes = [8, 128], strides = [1, 1]} : vector<8x512xf32> to vector<8x128xf32>
    %61 = arith.negf %60 : vector<8x128xf32>
    %62 = math.exp %61 : vector<8x128xf32>
    %cst_29 = arith.constant 1.000000e+00 : f32
    %63 = vector.broadcast %cst_29 : f32 to vector<8x128xf32>
    %64 = arith.addf %63, %62 : vector<8x128xf32>
    %65 = arith.divf %63, %64 : vector<8x128xf32>
    %66 = vector.extract_strided_slice %53 {offsets = [0, 256], sizes = [8, 128], strides = [1, 1]} : vector<8x512xf32> to vector<8x128xf32>
    %67 = math.tanh %66 : vector<8x128xf32>
    %68 = vector.extract_strided_slice %53 {offsets = [0, 384], sizes = [8, 128], strides = [1, 1]} : vector<8x512xf32> to vector<8x128xf32>
    %69 = arith.negf %68 : vector<8x128xf32>
    %70 = math.exp %69 : vector<8x128xf32>
    %cst_30 = arith.constant 1.000000e+00 : f32
    %71 = vector.broadcast %cst_30 : f32 to vector<8x128xf32>
    %72 = arith.addf %71, %70 : vector<8x128xf32>
    %73 = arith.divf %71, %72 : vector<8x128xf32>
    %74 = arith.mulf %65, %42 : vector<8x128xf32>
    %75 = arith.mulf %59, %67 : vector<8x128xf32>
    %76 = arith.addf %74, %75 : vector<8x128xf32>
    %77 = math.tanh %76 : vector<8x128xf32>
    %78 = arith.mulf %73, %77 : vector<8x128xf32>
    %79 = arith.index_cast %c1_i32 : i32 to index
    %c0_31 = arith.constant 0 : index
    %c0_32 = arith.constant 0 : index
    %80 = vector.load %arg6[%79, %c0_31, %c0_32] : memref<8x8x128xf32, #tpu.memory_space<vmem>>, vector<1x8x128xf32>
    %81 = vector.shape_cast %80 : vector<1x8x128xf32> to vector<8x128xf32>
    %82 = vector.shape_cast %78 : vector<8x128xf32> to vector<1x8x128xf32>
    tpu.vector_store %arg6[%79, %c0_31, %c0_32], %82 {strides = array<i32>} : memref<8x8x128xf32, #tpu.memory_space<vmem>>, vector<1x8x128xf32>,
    %c2_i32 = arith.constant 2 : i32
    %83 = arith.index_cast %c2_i32 : i32 to index
    %c0_33 = arith.constant 0 : index
    %c0_34 = arith.constant 0 : index
    %84 = vector.load %arg9[%83, %c0_33, %c0_34] : memref<8x8x512xf32, #tpu.memory_space<vmem>>, vector<1x8x512xf32>
    %85 = vector.shape_cast %84 : vector<1x8x512xf32> to vector<8x512xf32>
    %cst_35 = arith.constant dense<0.000000e+00> : vector<8x512xf32>
    %86 = tpu.matmul %78, %12, %cst_35 {dimension_numbers = #tpu.dot_dimension_numbers<[1], [0], [0], [1], [0, 0, 1, 1], [], []>} : vector<8x128xf32>, vector<128x512xf32>, vector<8x512xf32> -> vector<8x512xf32>
    %87 = arith.addf %85, %86 : vector<8x512xf32>
    %88 = vector.extract_strided_slice %87 {offsets = [0, 0], sizes = [8, 128], strides = [1, 1]} : vector<8x512xf32> to vector<8x128xf32>
    %89 = arith.negf %88 : vector<8x128xf32>
    %90 = math.exp %89 : vector<8x128xf32>
    %cst_36 = arith.constant 1.000000e+00 : f32
    %91 = vector.broadcast %cst_36 : f32 to vector<8x128xf32>
    %92 = arith.addf %91, %90 : vector<8x128xf32>
    %93 = arith.divf %91, %92 : vector<8x128xf32>
    %94 = vector.extract_strided_slice %87 {offsets = [0, 128], sizes = [8, 128], strides = [1, 1]} : vector<8x512xf32> to vector<8x128xf32>
    %95 = arith.negf %94 : vector<8x128xf32>
    %96 = math.exp %95 : vector<8x128xf32>
    %cst_37 = arith.constant 1.000000e+00 : f32
    %97 = vector.broadcast %cst_37 : f32 to vector<8x128xf32>
    %98 = arith.addf %97, %96 : vector<8x128xf32>
    %99 = arith.divf %97, %98 : vector<8x128xf32>
    %100 = vector.extract_strided_slice %87 {offsets = [0, 256], sizes = [8, 128], strides = [1, 1]} : vector<8x512xf32> to vector<8x128xf32>
    %101 = math.tanh %100 : vector<8x128xf32>
    %102 = vector.extract_strided_slice %87 {offsets = [0, 384], sizes = [8, 128], strides = [1, 1]} : vector<8x512xf32> to vector<8x128xf32>
    %103 = arith.negf %102 : vector<8x128xf32>
    %104 = math.exp %103 : vector<8x128xf32>
    %cst_38 = arith.constant 1.000000e+00 : f32
    %105 = vector.broadcast %cst_38 : f32 to vector<8x128xf32>
    %106 = arith.addf %105, %104 : vector<8x128xf32>
    %107 = arith.divf %105, %106 : vector<8x128xf32>
    %108 = arith.mulf %99, %76 : vector<8x128xf32>
    %109 = arith.mulf %93, %101 : vector<8x128xf32>
    %110 = arith.addf %108, %109 : vector<8x128xf32>
    %111 = math.tanh %110 : vector<8x128xf32>
    %112 = arith.mulf %107, %111 : vector<8x128xf32>
    %113 = arith.index_cast %c2_i32 : i32 to index
    %c0_39 = arith.constant 0 : index
    %c0_40 = arith.constant 0 : index
    %114 = vector.load %arg6[%113, %c0_39, %c0_40] : memref<8x8x128xf32, #tpu.memory_space<vmem>>, vector<1x8x128xf32>
    %115 = vector.shape_cast %114 : vector<1x8x128xf32> to vector<8x128xf32>
    %116 = vector.shape_cast %112 : vector<8x128xf32> to vector<1x8x128xf32>
    tpu.vector_store %arg6[%113, %c0_39, %c0_40], %116 {strides = array<i32>} : memref<8x8x128xf32, #tpu.memory_space<vmem>>, vector<1x8x128xf32>,
    %c3_i32 = arith.constant 3 : i32
    %117 = arith.index_cast %c3_i32 : i32 to index
    %c0_41 = arith.constant 0 : index
    %c0_42 = arith.constant 0 : index
    %118 = vector.load %arg9[%117, %c0_41, %c0_42] : memref<8x8x512xf32, #tpu.memory_space<vmem>>, vector<1x8x512xf32>
    %119 = vector.shape_cast %118 : vector<1x8x512xf32> to vector<8x512xf32>
    %cst_43 = arith.constant dense<0.000000e+00> : vector<8x512xf32>
    %120 = tpu.matmul %112, %12, %cst_43 {dimension_numbers = #tpu.dot_dimension_numbers<[1], [0], [0], [1], [0, 0, 1, 1], [], []>} : vector<8x128xf32>, vector<128x512xf32>, vector<8x512xf32> -> vector<8x512xf32>
    %121 = arith.addf %119, %120 : vector<8x512xf32>
    %122 = vector.extract_strided_slice %121 {offsets = [0, 0], sizes = [8, 128], strides = [1, 1]} : vector<8x512xf32> to vector<8x128xf32>
    %123 = arith.negf %122 : vector<8x128xf32>
    %124 = math.exp %123 : vector<8x128xf32>
    %cst_44 = arith.constant 1.000000e+00 : f32
    %125 = vector.broadcast %cst_44 : f32 to vector<8x128xf32>
    %126 = arith.addf %125, %124 : vector<8x128xf32>
    %127 = arith.divf %125, %126 : vector<8x128xf32>
    %128 = vector.extract_strided_slice %121 {offsets = [0, 128], sizes = [8, 128], strides = [1, 1]} : vector<8x512xf32> to vector<8x128xf32>
    %129 = arith.negf %128 : vector<8x128xf32>
    %130 = math.exp %129 : vector<8x128xf32>
    %cst_45 = arith.constant 1.000000e+00 : f32
    %131 = vector.broadcast %cst_45 : f32 to vector<8x128xf32>
    %132 = arith.addf %131, %130 : vector<8x128xf32>
    %133 = arith.divf %131, %132 : vector<8x128xf32>
    %134 = vector.extract_strided_slice %121 {offsets = [0, 256], sizes = [8, 128], strides = [1, 1]} : vector<8x512xf32> to vector<8x128xf32>
    %135 = math.tanh %134 : vector<8x128xf32>
    %136 = vector.extract_strided_slice %121 {offsets = [0, 384], sizes = [8, 128], strides = [1, 1]} : vector<8x512xf32> to vector<8x128xf32>
    %137 = arith.negf %136 : vector<8x128xf32>
    %138 = math.exp %137 : vector<8x128xf32>
    %cst_46 = arith.constant 1.000000e+00 : f32
    %139 = vector.broadcast %cst_46 : f32 to vector<8x128xf32>
    %140 = arith.addf %139, %138 : vector<8x128xf32>
    %141 = arith.divf %139, %140 : vector<8x128xf32>
    %142 = arith.mulf %133, %110 : vector<8x128xf32>
    %143 = arith.mulf %127, %135 : vector<8x128xf32>
    %144 = arith.addf %142, %143 : vector<8x128xf32>
    %145 = math.tanh %144 : vector<8x128xf32>
    %146 = arith.mulf %141, %145 : vector<8x128xf32>
    %147 = arith.index_cast %c3_i32 : i32 to index
    %c0_47 = arith.constant 0 : index
    %c0_48 = arith.constant 0 : index
    %148 = vector.load %arg6[%147, %c0_47, %c0_48] : memref<8x8x128xf32, #tpu.memory_space<vmem>>, vector<1x8x128xf32>
    %149 = vector.shape_cast %148 : vector<1x8x128xf32> to vector<8x128xf32>
    %150 = vector.shape_cast %146 : vector<8x128xf32> to vector<1x8x128xf32>
    tpu.vector_store %arg6[%147, %c0_47, %c0_48], %150 {strides = array<i32>} : memref<8x8x128xf32, #tpu.memory_space<vmem>>, vector<1x8x128xf32>,
    %c4_i32 = arith.constant 4 : i32
    %151 = arith.index_cast %c4_i32 : i32 to index
    %c0_49 = arith.constant 0 : index
    %c0_50 = arith.constant 0 : index
    %152 = vector.load %arg9[%151, %c0_49, %c0_50] : memref<8x8x512xf32, #tpu.memory_space<vmem>>, vector<1x8x512xf32>
    %153 = vector.shape_cast %152 : vector<1x8x512xf32> to vector<8x512xf32>
    %cst_51 = arith.constant dense<0.000000e+00> : vector<8x512xf32>
    %154 = tpu.matmul %146, %12, %cst_51 {dimension_numbers = #tpu.dot_dimension_numbers<[1], [0], [0], [1], [0, 0, 1, 1], [], []>} : vector<8x128xf32>, vector<128x512xf32>, vector<8x512xf32> -> vector<8x512xf32>
    %155 = arith.addf %153, %154 : vector<8x512xf32>
    %156 = vector.extract_strided_slice %155 {offsets = [0, 0], sizes = [8, 128], strides = [1, 1]} : vector<8x512xf32> to vector<8x128xf32>
    %157 = arith.negf %156 : vector<8x128xf32>
    %158 = math.exp %157 : vector<8x128xf32>
    %cst_52 = arith.constant 1.000000e+00 : f32
    %159 = vector.broadcast %cst_52 : f32 to vector<8x128xf32>
    %160 = arith.addf %159, %158 : vector<8x128xf32>
    %161 = arith.divf %159, %160 : vector<8x128xf32>
    %162 = vector.extract_strided_slice %155 {offsets = [0, 128], sizes = [8, 128], strides = [1, 1]} : vector<8x512xf32> to vector<8x128xf32>
    %163 = arith.negf %162 : vector<8x128xf32>
    %164 = math.exp %163 : vector<8x128xf32>
    %cst_53 = arith.constant 1.000000e+00 : f32
    %165 = vector.broadcast %cst_53 : f32 to vector<8x128xf32>
    %166 = arith.addf %165, %164 : vector<8x128xf32>
    %167 = arith.divf %165, %166 : vector<8x128xf32>
    %168 = vector.extract_strided_slice %155 {offsets = [0, 256], sizes = [8, 128], strides = [1, 1]} : vector<8x512xf32> to vector<8x128xf32>
    %169 = math.tanh %168 : vector<8x128xf32>
    %170 = vector.extract_strided_slice %155 {offsets = [0, 384], sizes = [8, 128], strides = [1, 1]} : vector<8x512xf32> to vector<8x128xf32>
    %171 = arith.negf %170 : vector<8x128xf32>
    %172 = math.exp %171 : vector<8x128xf32>
    %cst_54 = arith.constant 1.000000e+00 : f32
    %173 = vector.broadcast %cst_54 : f32 to vector<8x128xf32>
    %174 = arith.addf %173, %172 : vector<8x128xf32>
    %175 = arith.divf %173, %174 : vector<8x128xf32>
    %176 = arith.mulf %167, %144 : vector<8x128xf32>
    %177 = arith.mulf %161, %169 : vector<8x128xf32>
    %178 = arith.addf %176, %177 : vector<8x128xf32>
    %179 = math.tanh %178 : vector<8x128xf32>
    %180 = arith.mulf %175, %179 : vector<8x128xf32>
    %181 = arith.index_cast %c4_i32 : i32 to index
    %c0_55 = arith.constant 0 : index
    %c0_56 = arith.constant 0 : index
    %182 = vector.load %arg6[%181, %c0_55, %c0_56] : memref<8x8x128xf32, #tpu.memory_space<vmem>>, vector<1x8x128xf32>
    %183 = vector.shape_cast %182 : vector<1x8x128xf32> to vector<8x128xf32>
    %184 = vector.shape_cast %180 : vector<8x128xf32> to vector<1x8x128xf32>
    tpu.vector_store %arg6[%181, %c0_55, %c0_56], %184 {strides = array<i32>} : memref<8x8x128xf32, #tpu.memory_space<vmem>>, vector<1x8x128xf32>,
    %c5_i32 = arith.constant 5 : i32
    %185 = arith.index_cast %c5_i32 : i32 to index
    %c0_57 = arith.constant 0 : index
    %c0_58 = arith.constant 0 : index
    %186 = vector.load %arg9[%185, %c0_57, %c0_58] : memref<8x8x512xf32, #tpu.memory_space<vmem>>, vector<1x8x512xf32>
    %187 = vector.shape_cast %186 : vector<1x8x512xf32> to vector<8x512xf32>
    %cst_59 = arith.constant dense<0.000000e+00> : vector<8x512xf32>
    %188 = tpu.matmul %180, %12, %cst_59 {dimension_numbers = #tpu.dot_dimension_numbers<[1], [0], [0], [1], [0, 0, 1, 1], [], []>} : vector<8x128xf32>, vector<128x512xf32>, vector<8x512xf32> -> vector<8x512xf32>
    %189 = arith.addf %187, %188 : vector<8x512xf32>
    %190 = vector.extract_strided_slice %189 {offsets = [0, 0], sizes = [8, 128], strides = [1, 1]} : vector<8x512xf32> to vector<8x128xf32>
    %191 = arith.negf %190 : vector<8x128xf32>
    %192 = math.exp %191 : vector<8x128xf32>
    %cst_60 = arith.constant 1.000000e+00 : f32
    %193 = vector.broadcast %cst_60 : f32 to vector<8x128xf32>
    %194 = arith.addf %193, %192 : vector<8x128xf32>
    %195 = arith.divf %193, %194 : vector<8x128xf32>
    %196 = vector.extract_strided_slice %189 {offsets = [0, 128], sizes = [8, 128], strides = [1, 1]} : vector<8x512xf32> to vector<8x128xf32>
    %197 = arith.negf %196 : vector<8x128xf32>
    %198 = math.exp %197 : vector<8x128xf32>
    %cst_61 = arith.constant 1.000000e+00 : f32
    %199 = vector.broadcast %cst_61 : f32 to vector<8x128xf32>
    %200 = arith.addf %199, %198 : vector<8x128xf32>
    %201 = arith.divf %199, %200 : vector<8x128xf32>
    %202 = vector.extract_strided_slice %189 {offsets = [0, 256], sizes = [8, 128], strides = [1, 1]} : vector<8x512xf32> to vector<8x128xf32>
    %203 = math.tanh %202 : vector<8x128xf32>
    %204 = vector.extract_strided_slice %189 {offsets = [0, 384], sizes = [8, 128], strides = [1, 1]} : vector<8x512xf32> to vector<8x128xf32>
    %205 = arith.negf %204 : vector<8x128xf32>
    %206 = math.exp %205 : vector<8x128xf32>
    %cst_62 = arith.constant 1.000000e+00 : f32
    %207 = vector.broadcast %cst_62 : f32 to vector<8x128xf32>
    %208 = arith.addf %207, %206 : vector<8x128xf32>
    %209 = arith.divf %207, %208 : vector<8x128xf32>
    %210 = arith.mulf %201, %178 : vector<8x128xf32>
    %211 = arith.mulf %195, %203 : vector<8x128xf32>
    %212 = arith.addf %210, %211 : vector<8x128xf32>
    %213 = math.tanh %212 : vector<8x128xf32>
    %214 = arith.mulf %209, %213 : vector<8x128xf32>
    %215 = arith.index_cast %c5_i32 : i32 to index
    %c0_63 = arith.constant 0 : index
    %c0_64 = arith.constant 0 : index
    %216 = vector.load %arg6[%215, %c0_63, %c0_64] : memref<8x8x128xf32, #tpu.memory_space<vmem>>, vector<1x8x128xf32>
    %217 = vector.shape_cast %216 : vector<1x8x128xf32> to vector<8x128xf32>
    %218 = vector.shape_cast %214 : vector<8x128xf32> to vector<1x8x128xf32>
    tpu.vector_store %arg6[%215, %c0_63, %c0_64], %218 {strides = array<i32>} : memref<8x8x128xf32, #tpu.memory_space<vmem>>, vector<1x8x128xf32>,
    %c6_i32 = arith.constant 6 : i32
    %219 = arith.index_cast %c6_i32 : i32 to index
    %c0_65 = arith.constant 0 : index
    %c0_66 = arith.constant 0 : index
    %220 = vector.load %arg9[%219, %c0_65, %c0_66] : memref<8x8x512xf32, #tpu.memory_space<vmem>>, vector<1x8x512xf32>
    %221 = vector.shape_cast %220 : vector<1x8x512xf32> to vector<8x512xf32>
    %cst_67 = arith.constant dense<0.000000e+00> : vector<8x512xf32>
    %222 = tpu.matmul %214, %12, %cst_67 {dimension_numbers = #tpu.dot_dimension_numbers<[1], [0], [0], [1], [0, 0, 1, 1], [], []>} : vector<8x128xf32>, vector<128x512xf32>, vector<8x512xf32> -> vector<8x512xf32>
    %223 = arith.addf %221, %222 : vector<8x512xf32>
    %224 = vector.extract_strided_slice %223 {offsets = [0, 0], sizes = [8, 128], strides = [1, 1]} : vector<8x512xf32> to vector<8x128xf32>
    %225 = arith.negf %224 : vector<8x128xf32>
    %226 = math.exp %225 : vector<8x128xf32>
    %cst_68 = arith.constant 1.000000e+00 : f32
    %227 = vector.broadcast %cst_68 : f32 to vector<8x128xf32>
    %228 = arith.addf %227, %226 : vector<8x128xf32>
    %229 = arith.divf %227, %228 : vector<8x128xf32>
    %230 = vector.extract_strided_slice %223 {offsets = [0, 128], sizes = [8, 128], strides = [1, 1]} : vector<8x512xf32> to vector<8x128xf32>
    %231 = arith.negf %230 : vector<8x128xf32>
    %232 = math.exp %231 : vector<8x128xf32>
    %cst_69 = arith.constant 1.000000e+00 : f32
    %233 = vector.broadcast %cst_69 : f32 to vector<8x128xf32>
    %234 = arith.addf %233, %232 : vector<8x128xf32>
    %235 = arith.divf %233, %234 : vector<8x128xf32>
    %236 = vector.extract_strided_slice %223 {offsets = [0, 256], sizes = [8, 128], strides = [1, 1]} : vector<8x512xf32> to vector<8x128xf32>
    %237 = math.tanh %236 : vector<8x128xf32>
    %238 = vector.extract_strided_slice %223 {offsets = [0, 384], sizes = [8, 128], strides = [1, 1]} : vector<8x512xf32> to vector<8x128xf32>
    %239 = arith.negf %238 : vector<8x128xf32>
    %240 = math.exp %239 : vector<8x128xf32>
    %cst_70 = arith.constant 1.000000e+00 : f32
    %241 = vector.broadcast %cst_70 : f32 to vector<8x128xf32>
    %242 = arith.addf %241, %240 : vector<8x128xf32>
    %243 = arith.divf %241, %242 : vector<8x128xf32>
    %244 = arith.mulf %235, %212 : vector<8x128xf32>
    %245 = arith.mulf %229, %237 : vector<8x128xf32>
    %246 = arith.addf %244, %245 : vector<8x128xf32>
    %247 = math.tanh %246 : vector<8x128xf32>
    %248 = arith.mulf %243, %247 : vector<8x128xf32>
    %249 = arith.index_cast %c6_i32 : i32 to index
    %c0_71 = arith.constant 0 : index
    %c0_72 = arith.constant 0 : index
    %250 = vector.load %arg6[%249, %c0_71, %c0_72] : memref<8x8x128xf32, #tpu.memory_space<vmem>>, vector<1x8x128xf32>
    %251 = vector.shape_cast %250 : vector<1x8x128xf32> to vector<8x128xf32>
    %252 = vector.shape_cast %248 : vector<8x128xf32> to vector<1x8x128xf32>
    tpu.vector_store %arg6[%249, %c0_71, %c0_72], %252 {strides = array<i32>} : memref<8x8x128xf32, #tpu.memory_space<vmem>>, vector<1x8x128xf32>,
    %c7_i32 = arith.constant 7 : i32
    %253 = arith.index_cast %c7_i32 : i32 to index
    %c0_73 = arith.constant 0 : index
    %c0_74 = arith.constant 0 : index
    %254 = vector.load %arg9[%253, %c0_73, %c0_74] : memref<8x8x512xf32, #tpu.memory_space<vmem>>, vector<1x8x512xf32>
    %255 = vector.shape_cast %254 : vector<1x8x512xf32> to vector<8x512xf32>
    %cst_75 = arith.constant dense<0.000000e+00> : vector<8x512xf32>
    %256 = tpu.matmul %248, %12, %cst_75 {dimension_numbers = #tpu.dot_dimension_numbers<[1], [0], [0], [1], [0, 0, 1, 1], [], []>} : vector<8x128xf32>, vector<128x512xf32>, vector<8x512xf32> -> vector<8x512xf32>
    %257 = arith.addf %255, %256 : vector<8x512xf32>
    %258 = vector.extract_strided_slice %257 {offsets = [0, 0], sizes = [8, 128], strides = [1, 1]} : vector<8x512xf32> to vector<8x128xf32>
    %259 = arith.negf %258 : vector<8x128xf32>
    %260 = math.exp %259 : vector<8x128xf32>
    %cst_76 = arith.constant 1.000000e+00 : f32
    %261 = vector.broadcast %cst_76 : f32 to vector<8x128xf32>
    %262 = arith.addf %261, %260 : vector<8x128xf32>
    %263 = arith.divf %261, %262 : vector<8x128xf32>
    %264 = vector.extract_strided_slice %257 {offsets = [0, 128], sizes = [8, 128], strides = [1, 1]} : vector<8x512xf32> to vector<8x128xf32>
    %265 = arith.negf %264 : vector<8x128xf32>
    %266 = math.exp %265 : vector<8x128xf32>
    %cst_77 = arith.constant 1.000000e+00 : f32
    %267 = vector.broadcast %cst_77 : f32 to vector<8x128xf32>
    %268 = arith.addf %267, %266 : vector<8x128xf32>
    %269 = arith.divf %267, %268 : vector<8x128xf32>
    %270 = vector.extract_strided_slice %257 {offsets = [0, 256], sizes = [8, 128], strides = [1, 1]} : vector<8x512xf32> to vector<8x128xf32>
    %271 = math.tanh %270 : vector<8x128xf32>
    %272 = vector.extract_strided_slice %257 {offsets = [0, 384], sizes = [8, 128], strides = [1, 1]} : vector<8x512xf32> to vector<8x128xf32>
    %273 = arith.negf %272 : vector<8x128xf32>
    %274 = math.exp %273 : vector<8x128xf32>
    %cst_78 = arith.constant 1.000000e+00 : f32
    %275 = vector.broadcast %cst_78 : f32 to vector<8x128xf32>
    %276 = arith.addf %275, %274 : vector<8x128xf32>
    %277 = arith.divf %275, %276 : vector<8x128xf32>
    %278 = arith.mulf %269, %246 : vector<8x128xf32>
    %279 = arith.mulf %263, %271 : vector<8x128xf32>
    %280 = arith.addf %278, %279 : vector<8x128xf32>
    %281 = math.tanh %280 : vector<8x128xf32>
    %282 = arith.mulf %277, %281 : vector<8x128xf32>
    %283 = arith.index_cast %c7_i32 : i32 to index
    %c0_79 = arith.constant 0 : index
    %c0_80 = arith.constant 0 : index
    %284 = vector.load %arg6[%283, %c0_79, %c0_80] : memref<8x8x128xf32, #tpu.memory_space<vmem>>, vector<1x8x128xf32>
    %285 = vector.shape_cast %284 : vector<1x8x128xf32> to vector<8x128xf32>
    %286 = vector.shape_cast %282 : vector<8x128xf32> to vector<1x8x128xf32>
    tpu.vector_store %arg6[%283, %c0_79, %c0_80], %286 {strides = array<i32>} : memref<8x8x128xf32, #tpu.memory_space<vmem>>, vector<1x8x128xf32>,
    %c8_i32 = arith.constant 8 : i32
    %c0_81 = arith.constant 0 : index
    %c0_82 = arith.constant 0 : index
    %287 = vector.load %arg7[%c0_81, %c0_82] : memref<8x128xf32, #tpu.memory_space<vmem>>, vector<8x128xf32>
    tpu.vector_store %arg7[%c0_81, %c0_82], %282 {strides = array<i32>} : memref<8x128xf32, #tpu.memory_space<vmem>>, vector<8x128xf32>,
    %c0_83 = arith.constant 0 : index
    %c0_84 = arith.constant 0 : index
    %288 = vector.load %arg8[%c0_83, %c0_84] : memref<8x128xf32, #tpu.memory_space<vmem>>, vector<8x128xf32>
    tpu.vector_store %arg8[%c0_83, %c0_84], %280 {strides = array<i32>} : memref<8x128xf32, #tpu.memory_space<vmem>>, vector<8x128xf32>,
    return
  }
  func.func @transform_0(%arg0: i32, %arg1: i32) -> (i32, i32, i32) {
    %c0_i32 = arith.constant 0 : i32
    %c0_i32_0 = arith.constant 0 : i32
    return %arg1, %arg0, %c0_i32 : i32, i32, i32
  }
  func.func @transform_1(%arg0: i32, %arg1: i32) -> (i32, i32) {
    %c0_i32 = arith.constant 0 : i32
    %c0_i32_0 = arith.constant 0 : i32
    %c0_i32_1 = arith.constant 0 : i32
    return %c0_i32, %c0_i32_0 : i32, i32
  }
  func.func @transform_2(%arg0: i32, %arg1: i32) -> (i32, i32) {
    %c0_i32 = arith.constant 0 : i32
    %c0_i32_0 = arith.constant 0 : i32
    %c0_i32_1 = arith.constant 0 : i32
    return %c0_i32, %c0_i32_0 : i32, i32
  }
  func.func @transform_3(%arg0: i32, %arg1: i32) -> (i32, i32) {
    %c0_i32 = arith.constant 0 : i32
    %c0_i32_0 = arith.constant 0 : i32
    %c0_i32_1 = arith.constant 0 : i32
    return %c0_i32, %c0_i32_0 : i32, i32
  }
  func.func @transform_4(%arg0: i32, %arg1: i32) -> (i32, i32, i32) {
    %c0_i32 = arith.constant 0 : i32
    %c0_i32_0 = arith.constant 0 : i32
    return %arg1, %arg0, %c0_i32 : i32, i32, i32
  }
}

</mosaic_0001>

<llo_original>
// kernel: tpu_custom_call.1
$region0: #{tpu_custom_call.1}
  #allocation0 [shape = 'u32[]', space=smem, size = 0x4, offset = 0x4, fixed_abs, tag = 'smem constant byte address 0x4 - core index']
  #allocation1 [shape = 'u32[144,128]{1,0:T(1,128)}', space=vmem, size = 0x12000, scoped, tag = 'internal scratch']
  #allocation2 [shape = 'f32[8,128]{1,0:T(8,128)}', space=vmem, size = 0x1000, scoped, tag = 'scratch operand']
  #allocation3 [shape = 'f32[8,128]{1,0:T(8,128)}', space=vmem, size = 0x1000, scoped, tag = 'scratch operand']
  #allocation4 [shape = 'f32[8,8,512]{2,1,0:T(8,128)}', space=vmem, size = 0x20000, scoped, tag = 'scratch operand']
  %s0 = inlined_call_operand.hbm [shape: f32[8,8,32], index: 0, kind: input, shape index: {}]
  %s1 = inlined_call_operand.hbm [shape: f32[32,512], index: 1, kind: input, shape index: {}]
  %s2 = inlined_call_operand.hbm [shape: f32[128,512], index: 2, kind: input, shape index: {}]
  %s3 = inlined_call_operand.vmem [shape: f32[1,512], index: 3, kind: input, shape index: {}]
  %s4 = inlined_call_operand.hbm [shape: f32[8,8,128], index: 4, kind: output, shape index: {}]
  %s5 = sld [smem:[#allocation0]]
  $region42: #{tpu_custom_call.1} parent=0
    _
  %s7 = ssub.s32 1, %s5
  %s8 = scalar_select 0, %s7, %s5
  $region1: #{tpu_custom_call.1} parent=0
    #allocation5 [shape = 'u8[32768]{0}', space=vmem, size = 0x8000, scoped, tag = 'input window, operand 0, single buffered']
    #allocation6 [shape = 's32[1]{0}', space=sflag, size = 0x4, scoped, tag = 'scoped memory for tpu_custom_call.1']
    #allocation7 [shape = 's32[1]{0}', space=sflag, size = 0x4, scoped, tag = 'scoped memory for tpu_custom_call.1']
    #allocation8 [shape = 'u8[65536]{0}', space=vmem, size = 0x10000, scoped, tag = 'input window, operand 1, single buffered']
    #allocation9 [shape = 's32[1]{0}', space=sflag, size = 0x4, scoped, tag = 'scoped memory for tpu_custom_call.1']
    #allocation10 [shape = 'u8[262144]{0}', space=vmem, size = 0x40000, scoped, tag = 'input window, operand 2, single buffered']
    #allocation11 [shape = 'u8[32768]{0}', space=vmem, size = 0x8000, scoped, tag = 'output window, operand 0, single buffered']
    %9 = vsyncpa [#allocation6], 0
    %10 = vsyncpa [#allocation9], 0
    %11 = vsyncpa [#allocation7], 0
    // Predicated region
    $region2: #{tpu_custom_call.1} parent=1 // pred_check
      _
    $region3: #{tpu_custom_call.1} parent=1 // pred_check_branch
      %13 = sbr.rel (0) target = $region5
    $region4: #{tpu_custom_call.1} parent=1 // pred_region
      %s15 = ssub.s32 1024, 1024
      %16 = vsyncadd [#allocation6], %s15
      %s17 = sshll.u32 [#allocation5], 4
      %s18 = int_to_ptr.vmem [resolvable:$true] %s17
      %23 = dma.hbm_to_vmem [thread:$0]  %s0, 1024, %s18, [#allocation6], 128, 128, 8
    $region5: #{tpu_custom_call.1} parent=1 // pred_fallthru
      _
    // Predicated region
    $region6: #{tpu_custom_call.1} parent=1 // pred_check
      _
    $region7: #{tpu_custom_call.1} parent=1 // pred_check_branch
      %25 = sbr.rel (0) target = $region9
    $region8: #{tpu_custom_call.1} parent=1 // pred_region
      %s27 = ssub.s32 2048, 2048
      %28 = vsyncadd [#allocation9], %s27
      %s29 = sshll.u32 [#allocation8], 4
      %s30 = int_to_ptr.vmem [resolvable:$true] %s29
      %35 = dma.hbm_to_vmem [thread:$0]  %s1, 2048, %s30, [#allocation9], 512, 512, 32
    $region9: #{tpu_custom_call.1} parent=1 // pred_fallthru
      _
    // Predicated region
    $region10: #{tpu_custom_call.1} parent=1 // pred_check
      _
    $region11: #{tpu_custom_call.1} parent=1 // pred_check_branch
      %37 = sbr.rel (0) target = $region13
    $region12: #{tpu_custom_call.1} parent=1 // pred_region
      %s39 = ssub.s32 8192, 8192
      %40 = vsyncadd [#allocation9], %s39
      %s41 = sshll.u32 [#allocation10], 4
      %s42 = int_to_ptr.vmem [resolvable:$true] %s41
      %47 = dma.hbm_to_vmem [thread:$0]  %s2, 8192, %s42, [#allocation9], 512, 512, 32
    $region13: #{tpu_custom_call.1} parent=1 // pred_fallthru
      _
    // Predicated region
    $region14: #{tpu_custom_call.1} parent=1 // pred_check
      _
    $region15: #{tpu_custom_call.1} parent=1 // pred_check_branch
      %49 = sbr.rel (0) target = $region17
    $region16: #{tpu_custom_call.1} parent=1 // pred_region
      _
    $region17: #{tpu_custom_call.1} parent=1 // pred_fallthru
      _
    // Predicated region
    $region18: #{tpu_custom_call.1} parent=1 // pred_check
      _
    $region19: #{tpu_custom_call.1} parent=1 // pred_check_branch
      %51 = sbr.rel (0) target = $region21
    $region20: #{tpu_custom_call.1} parent=1 // pred_region
      %52 = dma.done [#allocation6], 1024
    $region21: #{tpu_custom_call.1} parent=1 // pred_fallthru
      _
    // Predicated region
    $region22: #{tpu_custom_call.1} parent=1 // pred_check
      _
    $region23: #{tpu_custom_call.1} parent=1 // pred_check_branch
      %54 = sbr.rel (0) target = $region25
    $region24: #{tpu_custom_call.1} parent=1 // pred_region
      %55 = dma.done [#allocation9], 2048
    $region25: #{tpu_custom_call.1} parent=1 // pred_fallthru
      _
    // Predicated region
    $region26: #{tpu_custom_call.1} parent=1 // pred_check
      _
    $region27: #{tpu_custom_call.1} parent=1 // pred_check_branch
      %57 = sbr.rel (0) target = $region29
    $region28: #{tpu_custom_call.1} parent=1 // pred_region
      %58 = dma.done [#allocation9], 8192
    $region29: #{tpu_custom_call.1} parent=1 // pred_fallthru
      _
    %p59 = scmp.eq.s32.totalorder 0, 0
    // Predicated region
    $region30: #{tpu_custom_call.1} parent=1 // pred_check
      %p60 = pneg %p59
    $region31: #{tpu_custom_call.1} parent=1 // pred_check_branch
      %62 = sbr.rel (%p60) target = $region33
    $region32: #{tpu_custom_call.1} parent=1 // pred_region
      %63 = vst [vmem:[#allocation2] sm:$0xff] 0.0
      %64 = vst [vmem:[#allocation3] sm:$0xff] 0.0
    $region33: #{tpu_custom_call.1} parent=1 // pred_fallthru
      _
    %v65 = vld [vmem:[#allocation5] sm:$0xff]
    %v66 = vld [vmem:[#allocation5 + $0x8] sm:$0xff]
    %v67 = vld [vmem:[#allocation5 + $0x10] sm:$0xff]
    %v68 = vld [vmem:[#allocation5 + $0x18] sm:$0xff]
    %v69 = vld [vmem:[#allocation5 + $0x20] sm:$0xff]
    %v70 = vld [vmem:[#allocation5 + $0x28] sm:$0xff]
    %v71 = vld [vmem:[#allocation5 + $0x30] sm:$0xff]
    %v72 = vld [vmem:[#allocation5 + $0x38] sm:$0xff]
    %v73 = vld [vmem:[#allocation8] sm:$0xff]
    %v74 = vld [vmem:[#allocation8 + $0x8] sm:$0xff]
    %v75 = vld [vmem:[#allocation8 + $0x10] sm:$0xff]
    %v76 = vld [vmem:[#allocation8 + $0x18] sm:$0xff]
    %v77 = vld [vmem:[#allocation8 + $0x20] sm:$0xff]
    %v78 = vld [vmem:[#allocation8 + $0x28] sm:$0xff]
    %v79 = vld [vmem:[#allocation8 + $0x30] sm:$0xff]
    %v80 = vld [vmem:[#allocation8 + $0x38] sm:$0xff]
    %v81 = vld [vmem:[#allocation8 + $0x40] sm:$0xff]
    %v82 = vld [vmem:[#allocation8 + $0x48] sm:$0xff]
    %v83 = vld [vmem:[#allocation8 + $0x50] sm:$0xff]
    %v84 = vld [vmem:[#allocation8 + $0x58] sm:$0xff]
    %v85 = vld [vmem:[#allocation8 + $0x60] sm:$0xff]
    %v86 = vld [vmem:[#allocation8 + $0x68] sm:$0xff]
    %v87 = vld [vmem:[#allocation8 + $0x70] sm:$0xff]
    %v88 = vld [vmem:[#allocation8 + $0x78] sm:$0xff]
    %v89 = vld [vmem:[%s3] sm:$0xf]
    %v91 = vlaneseq
    %v92 = vshrl.u32 %v91, 7
    %v93 = vsub.s32 0, %v92
    %v94 = vrot.slane %v89, %v93
    %v95 = vlaneseq
    %v96 = vshrl.u32 %v95, 7
    %v97 = vsub.s32 1, %v96
    %v98 = vrot.slane %v89, %v97
    %v99 = vlaneseq
    %v100 = vshrl.u32 %v99, 7
    %v101 = vsub.s32 2, %v100
    %v102 = vrot.slane %v89, %v101
    %v103 = vlaneseq
    %v104 = vshrl.u32 %v103, 7
    %v105 = vsub.s32 3, %v104
    %v106 = vrot.slane %v89, %v105
    %vm111 = vcmask 261120
    %v113 = vsel %vm111, %v65, 0
    %v116 = vsel %vm111, %v66, 0
    %v119 = vsel %vm111, %v67, 0
    %v122 = vsel %vm111, %v68, 0
    %v125 = vsel %vm111, %v69, 0
    %v128 = vsel %vm111, %v70, 0
    %v131 = vsel %vm111, %v71, 0
    %v134 = vsel %vm111, %v72, 0
    %136 = vmatprep.subr.mxu0 %v74
    %137 = vmatpush1.msra.mxu0 %v73
    %138 = vmatprep.subr.mxu0 %v78
    %139 = vmatpush1.msra.mxu0 %v77
    %140 = vmatprep.subr.mxu0 %v82
    %141 = vmatpush1.msra.mxu0 %v81
    %142 = vmatprep.subr.mxu0 %v86
    %143 = vmatpush1.msra.mxu0 %v85
    %144 = vmatprep.subr.mxu0 0.0
    %145 = vmatpush1.msra.mxu0 0.0
    %146 = vmatprep.subr.mxu0 0.0
    %147 = vmatpush1.msra.mxu0 0.0
    %148 = vmatprep.subr.mxu0 0.0
    %149 = vmatpush1.msra.mxu0 0.0
    %150 = vmatprep.subr.mxu0 0.0
    %151 = vmatpush1.msra.mxu0 0.0
    %152 = vmatprep.subr.mxu0 0.0
    %153 = vmatpush1.msra.mxu0 0.0
    %154 = vmatprep.subr.mxu0 0.0
    %155 = vmatpush1.msra.mxu0 0.0
    %156 = vmatprep.subr.mxu0 0.0
    %157 = vmatpush1.msra.mxu0 0.0
    %158 = vmatprep.subr.mxu0 0.0
    %159 = vmatpush1.msra.mxu0 0.0
    %160 = vmatprep.subr.mxu0 0.0
    %161 = vmatpush1.msra.mxu0 0.0
    %162 = vmatprep.subr.mxu0 0.0
    %163 = vmatpush1.msra.mxu0 0.0
    %164 = vmatprep.subr.mxu0 0.0
    %165 = vmatpush1.msra.mxu0 0.0
    %166 = vmatprep.subr.mxu0 0.0
    %167 = vmatpush1.msra.mxu0 0.0
    %168 = vmatprep.subr.mxu0 0.0
    %169 = vmatpush1.msra.mxu0 0.0
    %170 = vmatprep.subr.mxu0 0.0
    %171 = vmatpush1.msra.mxu0 0.0
    %172 = vmatprep.subr.mxu0 0.0
    %173 = vmatpush1.msra.mxu0 0.0
    %174 = vmatprep.subr.mxu0 0.0
    %175 = vmatpush1.msra.mxu0 0.0
    %176 = vmatprep.subr.mxu0 0.0
    %177 = vmatpush1.msra.mxu0 0.0
    %178 = vmatprep.subr.mxu0 0.0
    %179 = vmatpush1.msra.mxu0 0.0
    %180 = vmatprep.subr.mxu0 0.0
    %181 = vmatpush1.msra.mxu0 0.0
    %182 = vmatprep.subr.mxu0 0.0
    %183 = vmatpush1.msra.mxu0 0.0
    %184 = vmatprep.subr.mxu0 0.0
    %185 = vmatpush1.msra.mxu0 0.0
    %186 = vmatprep.subr.mxu0 0.0
    %187 = vmatpush1.msra.mxu0 0.0
    %188 = vmatprep.subr.mxu0 0.0
    %189 = vmatpush1.msra.mxu0 0.0
    %190 = vmatprep.subr.mxu0 0.0
    %191 = vmatpush1.msra.mxu0 0.0
    %192 = vmatprep.subr.mxu0 0.0
    %193 = vmatpush1.msra.mxu0 0.0
    %194 = vmatprep.subr.mxu0 0.0
    %195 = vmatpush1.msra.mxu0 0.0
    %196 = vmatprep.subr.mxu0 0.0
    %197 = vmatpush1.msra.mxu0 0.0
    %198 = vmatprep.subr.mxu0 0.0
    %199 = vmatpush1.msra.mxu0 0.0
    %200 = vmatprep.mubr.f32.mxu0 0.0
    %201 = vmatmul.mubr.f32.gmra.mrb[0].mxu0 %v113
    %v202 = vpop.f32.mrb[0].mxu0
    %v203 = vadd.f32 %v94, %v202
    %v204 = vpop.f32.mrb[0].mxu0
    %v205 = vadd.f32 %v98, %v204
    %206 = vmatprep.mubr.f32.mxu0 0.0
    %207 = vmatmul.mubr.f32.gmra.mrb[0].mxu0 %v116
    %v208 = vpop.f32.mrb[0].mxu0
    %v209 = vadd.f32 %v94, %v208
    %v210 = vpop.f32.mrb[0].mxu0
    %v211 = vadd.f32 %v98, %v210
    %212 = vmatprep.mubr.f32.mxu0 0.0
    %213 = vmatmul.mubr.f32.gmra.mrb[0].mxu0 %v119
    %v214 = vpop.f32.mrb[0].mxu0
    %v215 = vadd.f32 %v94, %v214
    %v216 = vpop.f32.mrb[0].mxu0
    %v217 = vadd.f32 %v98, %v216
    %218 = vmatprep.mubr.f32.mxu0 0.0
    %219 = vmatmul.mubr.f32.gmra.mrb[0].mxu0 %v122
    %v220 = vpop.f32.mrb[0].mxu0
    %v221 = vadd.f32 %v94, %v220
    %v222 = vpop.f32.mrb[0].mxu0
    %v223 = vadd.f32 %v98, %v222
    %224 = vmatprep.mubr.f32.mxu0 0.0
    %225 = vmatmul.mubr.f32.gmra.mrb[0].mxu0 %v125
    %v226 = vpop.f32.mrb[0].mxu0
    %v227 = vadd.f32 %v94, %v226
    %v228 = vpop.f32.mrb[0].mxu0
    %v229 = vadd.f32 %v98, %v228
    %230 = vmatprep.mubr.f32.mxu0 0.0
    %231 = vmatmul.mubr.f32.gmra.mrb[0].mxu0 %v128
    %v232 = vpop.f32.mrb[0].mxu0
    %v233 = vadd.f32 %v94, %v232
    %v234 = vpop.f32.mrb[0].mxu0
    %v235 = vadd.f32 %v98, %v234
    %236 = vmatprep.mubr.f32.mxu0 0.0
    %237 = vmatmul.mubr.f32.gmra.mrb[0].mxu0 %v131
    %v238 = vpop.f32.mrb[0].mxu0
    %v239 = vadd.f32 %v94, %v238
    %v240 = vpop.f32.mrb[0].mxu0
    %v241 = vadd.f32 %v98, %v240
    %242 = vmatprep.mubr.f32.mxu0 0.0
    %243 = vmatmul.mubr.f32.gmra.mrb[0].mxu0 %v134
    %v244 = vpop.f32.mrb[0].mxu0
    %v245 = vadd.f32 %v94, %v244
    %v246 = vpop.f32.mrb[0].mxu0
    %v247 = vadd.f32 %v98, %v246
    %248 = vdwg.mxu0
    %249 = vmatprep.subr.mxu0 %v76
    %250 = vmatpush1.msra.mxu0 %v75
    %251 = vmatprep.subr.mxu0 %v80
    %252 = vmatpush1.msra.mxu0 %v79
    %253 = vmatprep.subr.mxu0 %v84
    %254 = vmatpush1.msra.mxu0 %v83
    %255 = vmatprep.subr.mxu0 %v88
    %256 = vmatpush1.msra.mxu0 %v87
    %257 = vmatprep.subr.mxu0 0.0
    %258 = vmatpush1.msra.mxu0 0.0
    %259 = vmatprep.subr.mxu0 0.0
    %260 = vmatpush1.msra.mxu0 0.0
    %261 = vmatprep.subr.mxu0 0.0
    %262 = vmatpush1.msra.mxu0 0.0
    %263 = vmatprep.subr.mxu0 0.0
    %264 = vmatpush1.msra.mxu0 0.0
    %265 = vmatprep.subr.mxu0 0.0
    %266 = vmatpush1.msra.mxu0 0.0
    %267 = vmatprep.subr.mxu0 0.0
    %268 = vmatpush1.msra.mxu0 0.0
    %269 = vmatprep.subr.mxu0 0.0
    %270 = vmatpush1.msra.mxu0 0.0
    %271 = vmatprep.subr.mxu0 0.0
    %272 = vmatpush1.msra.mxu0 0.0
    %273 = vmatprep.subr.mxu0 0.0
    %274 = vmatpush1.msra.mxu0 0.0
    %275 = vmatprep.subr.mxu0 0.0
    %276 = vmatpush1.msra.mxu0 0.0
    %277 = vmatprep.subr.mxu0 0.0
    %278 = vmatpush1.msra.mxu0 0.0
    %279 = vmatprep.subr.mxu0 0.0
    %280 = vmatpush1.msra.mxu0 0.0
    %281 = vmatprep.subr.mxu0 0.0
    %282 = vmatpush1.msra.mxu0 0.0
    %283 = vmatprep.subr.mxu0 0.0
    %284 = vmatpush1.msra.mxu0 0.0
    %285 = vmatprep.subr.mxu0 0.0
    %286 = vmatpush1.msra.mxu0 0.0
    %287 = vmatprep.subr.mxu0 0.0
    %288 = vmatpush1.msra.mxu0 0.0
    %289 = vmatprep.subr.mxu0 0.0
    %290 = vmatpush1.msra.mxu0 0.0
    %291 = vmatprep.subr.mxu0 0.0
    %292 = vmatpush1.msra.mxu0 0.0
    %293 = vmatprep.subr.mxu0 0.0
    %294 = vmatpush1.msra.mxu0 0.0
    %295 = vmatprep.subr.mxu0 0.0
    %296 = vmatpush1.msra.mxu0 0.0
    %297 = vmatprep.subr.mxu0 0.0
    %298 = vmatpush1.msra.mxu0 0.0
    %299 = vmatprep.subr.mxu0 0.0
    %300 = vmatpush1.msra.mxu0 0.0
    %301 = vmatprep.subr.mxu0 0.0
    %302 = vmatpush1.msra.mxu0 0.0
    %303 = vmatprep.subr.mxu0 0.0
    %304 = vmatpush1.msra.mxu0 0.0
    %305 = vmatprep.subr.mxu0 0.0
    %306 = vmatpush1.msra.mxu0 0.0
    %307 = vmatprep.subr.mxu0 0.0
    %308 = vmatpush1.msra.mxu0 0.0
    %309 = vmatprep.subr.mxu0 0.0
    %310 = vmatpush1.msra.mxu0 0.0
    %311 = vmatprep.subr.mxu0 0.0
    %312 = vmatpush1.msra.mxu0 0.0
    %313 = vmatprep.mubr.f32.mxu0 0.0
    %314 = vmatmul.mubr.f32.gmra.mrb[0].mxu0 %v113
    %v315 = vpop.f32.mrb[0].mxu0
    %v316 = vadd.f32 %v102, %v315
    %v317 = vpop.f32.mrb[0].mxu0
    %v318 = vadd.f32 %v106, %v317
    %319 = vmatprep.mubr.f32.mxu0 0.0
    %320 = vmatmul.mubr.f32.gmra.mrb[0].mxu0 %v116
    %v321 = vpop.f32.mrb[0].mxu0
    %v322 = vadd.f32 %v102, %v321
    %v323 = vpop.f32.mrb[0].mxu0
    %v324 = vadd.f32 %v106, %v323
    %325 = vmatprep.mubr.f32.mxu0 0.0
    %326 = vmatmul.mubr.f32.gmra.mrb[0].mxu0 %v119
    %v327 = vpop.f32.mrb[0].mxu0
    %v328 = vadd.f32 %v102, %v327
    %v329 = vpop.f32.mrb[0].mxu0
    %v330 = vadd.f32 %v106, %v329
    %331 = vmatprep.mubr.f32.mxu0 0.0
    %332 = vmatmul.mubr.f32.gmra.mrb[0].mxu0 %v122
    %v333 = vpop.f32.mrb[0].mxu0
    %v334 = vadd.f32 %v102, %v333
    %v335 = vpop.f32.mrb[0].mxu0
    %v336 = vadd.f32 %v106, %v335
    %337 = vmatprep.mubr.f32.mxu0 0.0
    %338 = vmatmul.mubr.f32.gmra.mrb[0].mxu0 %v125
    %v339 = vpop.f32.mrb[0].mxu0
    %v340 = vadd.f32 %v102, %v339
    %v341 = vpop.f32.mrb[0].mxu0
    %v342 = vadd.f32 %v106, %v341
    %343 = vmatprep.mubr.f32.mxu0 0.0
    %344 = vmatmul.mubr.f32.gmra.mrb[0].mxu0 %v128
    %v345 = vpop.f32.mrb[0].mxu0
    %v346 = vadd.f32 %v102, %v345
    %v347 = vpop.f32.mrb[0].mxu0
    %v348 = vadd.f32 %v106, %v347
    %349 = vmatprep.mubr.f32.mxu0 0.0
    %350 = vmatmul.mubr.f32.gmra.mrb[0].mxu0 %v131
    %v351 = vpop.f32.mrb[0].mxu0
    %v352 = vadd.f32 %v102, %v351
    %v353 = vpop.f32.mrb[0].mxu0
    %v354 = vadd.f32 %v106, %v353
    %355 = vmatprep.mubr.f32.mxu0 0.0
    %356 = vmatmul.mubr.f32.gmra.mrb[0].mxu0 %v134
    %v357 = vpop.f32.mrb[0].mxu0
    %v358 = vadd.f32 %v102, %v357
    %v359 = vpop.f32.mrb[0].mxu0
    %v360 = vadd.f32 %v106, %v359
    %361 = vdwg.mxu0
    %362 = vst [vmem:[#allocation4] sm:$0xff] %v203
    %363 = vst [vmem:[#allocation4 + $0x8] sm:$0xff] %v205
    %364 = vst [vmem:[#allocation4 + $0x10] sm:$0xff] %v316
    %365 = vst [vmem:[#allocation4 + $0x18] sm:$0xff] %v318
    %366 = vst [vmem:[#allocation4 + $0x20] sm:$0xff] %v209
    %367 = vst [vmem:[#allocation4 + $0x28] sm:$0xff] %v211
    %368 = vst [vmem:[#allocation4 + $0x30] sm:$0xff] %v322
    %369 = vst [vmem:[#allocation4 + $0x38] sm:$0xff] %v324
    %370 = vst [vmem:[#allocation4 + $0x40] sm:$0xff] %v215
    %371 = vst [vmem:[#allocation4 + $0x48] sm:$0xff] %v217
    %372 = vst [vmem:[#allocation4 + $0x50] sm:$0xff] %v328
    %373 = vst [vmem:[#allocation4 + $0x58] sm:$0xff] %v330
    %374 = vst [vmem:[#allocation4 + $0x60] sm:$0xff] %v221
    %375 = vst [vmem:[#allocation4 + $0x68] sm:$0xff] %v223
    %376 = vst [vmem:[#allocation4 + $0x70] sm:$0xff] %v334
    %377 = vst [vmem:[#allocation4 + $0x78] sm:$0xff] %v336
    %378 = vst [vmem:[#allocation4 + $0x80] sm:$0xff] %v227
    %379 = vst [vmem:[#allocation4 + $0x88] sm:$0xff] %v229
    %380 = vst [vmem:[#allocation4 + $0x90] sm:$0xff] %v340
    %381 = vst [vmem:[#allocation4 + $0x98] sm:$0xff] %v342
    %382 = vst [vmem:[#allocation4 + $0xa0] sm:$0xff] %v233
    %383 = vst [vmem:[#allocation4 + $0xa8] sm:$0xff] %v235
    %384 = vst [vmem:[#allocation4 + $0xb0] sm:$0xff] %v346
    %385 = vst [vmem:[#allocation4 + $0xb8] sm:$0xff] %v348
    %386 = vst [vmem:[#allocation4 + $0xc0] sm:$0xff] %v239
    %387 = vst [vmem:[#allocation4 + $0xc8] sm:$0xff] %v241
    %388 = vst [vmem:[#allocation4 + $0xd0] sm:$0xff] %v352
    %389 = vst [vmem:[#allocation4 + $0xd8] sm:$0xff] %v354
    %390 = vst [vmem:[#allocation4 + $0xe0] sm:$0xff] %v245
    %391 = vst [vmem:[#allocation4 + $0xe8] sm:$0xff] %v247
    %392 = vst [vmem:[#allocation4 + $0xf0] sm:$0xff] %v358
    %393 = vst [vmem:[#allocation4 + $0xf8] sm:$0xff] %v360
    %v394 = vld [vmem:[#allocation10] sm:$0xff]
    %v395 = vld [vmem:[#allocation10 + $0x8] sm:$0xff]
    %v396 = vld [vmem:[#allocation10 + $0x10] sm:$0xff]
    %v397 = vld [vmem:[#allocation10 + $0x18] sm:$0xff]
    %v398 = vld [vmem:[#allocation10 + $0x20] sm:$0xff]
    %v399 = vld [vmem:[#allocation10 + $0x28] sm:$0xff]
    %v400 = vld [vmem:[#allocation10 + $0x30] sm:$0xff]
    %v401 = vld [vmem:[#allocation10 + $0x38] sm:$0xff]
    %v402 = vld [vmem:[#allocation10 + $0x40] sm:$0xff]
    %v403 = vld [vmem:[#allocation10 + $0x48] sm:$0xff]
    %v404 = vld [vmem:[#allocation10 + $0x50] sm:$0xff]
    %v405 = vld [vmem:[#allocation10 + $0x58] sm:$0xff]
    %v406 = vld [vmem:[#allocation10 + $0x60] sm:$0xff]
    %v407 = vld [vmem:[#allocation10 + $0x68] sm:$0xff]
    %v408 = vld [vmem:[#allocation10 + $0x70] sm:$0xff]
    %v409 = vld [vmem:[#allocation10 + $0x78] sm:$0xff]
    %v410 = vld [vmem:[#allocation10 + $0x80] sm:$0xff]
    %v411 = vld [vmem:[#allocation10 + $0x88] sm:$0xff]
    %v412 = vld [vmem:[#allocation10 + $0x90] sm:$0xff]
    %v413 = vld [vmem:[#allocation10 + $0x98] sm:$0xff]
    %v414 = vld [vmem:[#allocation10 + $0xa0] sm:$0xff]
    %v415 = vld [vmem:[#allocation10 + $0xa8] sm:$0xff]
    %v416 = vld [vmem:[#allocation10 + $0xb0] sm:$0xff]
    %v417 = vld [vmem:[#allocation10 + $0xb8] sm:$0xff]
    %v418 = vld [vmem:[#allocation10 + $0xc0] sm:$0xff]
    %v419 = vld [vmem:[#allocation10 + $0xc8] sm:$0xff]
    %v420 = vld [vmem:[#allocation10 + $0xd0] sm:$0xff]
    %v421 = vld [vmem:[#allocation10 + $0xd8] sm:$0xff]
    %v422 = vld [vmem:[#allocation10 + $0xe0] sm:$0xff]
    %v423 = vld [vmem:[#allocation10 + $0xe8] sm:$0xff]
    %v424 = vld [vmem:[#allocation10 + $0xf0] sm:$0xff]
    %v425 = vld [vmem:[#allocation10 + $0xf8] sm:$0xff]
    %v426 = vld [vmem:[#allocation10 + $0x100] sm:$0xff]
    %v427 = vld [vmem:[#allocation10 + $0x108] sm:$0xff]
    %v428 = vld [vmem:[#allocation10 + $0x110] sm:$0xff]
    %v429 = vld [vmem:[#allocation10 + $0x118] sm:$0xff]
    %v430 = vld [vmem:[#allocation10 + $0x120] sm:$0xff]
    %v431 = vld [vmem:[#allocation10 + $0x128] sm:$0xff]
    %v432 = vld [vmem:[#allocation10 + $0x130] sm:$0xff]
    %v433 = vld [vmem:[#allocation10 + $0x138] sm:$0xff]
    %v434 = vld [vmem:[#allocation10 + $0x140] sm:$0xff]
    %v435 = vld [vmem:[#allocation10 + $0x148] sm:$0xff]
    %v436 = vld [vmem:[#allocation10 + $0x150] sm:$0xff]
    %v437 = vld [vmem:[#allocation10 + $0x158] sm:$0xff]
    %v438 = vld [vmem:[#allocation10 + $0x160] sm:$0xff]
    %v439 = vld [vmem:[#allocation10 + $0x168] sm:$0xff]
    %v440 = vld [vmem:[#allocation10 + $0x170] sm:$0xff]
    %v441 = vld [vmem:[#allocation10 + $0x178] sm:$0xff]
    %v442 = vld [vmem:[#allocation10 + $0x180] sm:$0xff]
    %v443 = vld [vmem:[#allocation10 + $0x188] sm:$0xff]
    %v444 = vld [vmem:[#allocation10 + $0x190] sm:$0xff]
    %v445 = vld [vmem:[#allocation10 + $0x198] sm:$0xff]
    %v446 = vld [vmem:[#allocation10 + $0x1a0] sm:$0xff]
    %v447 = vld [vmem:[#allocation10 + $0x1a8] sm:$0xff]
    %v448 = vld [vmem:[#allocation10 + $0x1b0] sm:$0xff]
    %v449 = vld [vmem:[#allocation10 + $0x1b8] sm:$0xff]
    %v450 = vld [vmem:[#allocation10 + $0x1c0] sm:$0xff]
    %v451 = vld [vmem:[#allocation10 + $0x1c8] sm:$0xff]
    %v452 = vld [vmem:[#allocation10 + $0x1d0] sm:$0xff]
    %v453 = vld [vmem:[#allocation10 + $0x1d8] sm:$0xff]
    %v454 = vld [vmem:[#allocation10 + $0x1e0] sm:$0xff]
    %v455 = vld [vmem:[#allocation10 + $0x1e8] sm:$0xff]
    %v456 = vld [vmem:[#allocation10 + $0x1f0] sm:$0xff]
    %v457 = vld [vmem:[#allocation10 + $0x1f8] sm:$0xff]
    %v458 = vld [vmem:[#allocation2] sm:$0xff]
    %v459 = vld [vmem:[#allocation3] sm:$0xff]
    %v460 = vld [vmem:[#allocation4] sm:$0xff]
    %v461 = vld [vmem:[#allocation4 + $0x8] sm:$0xff]
    %v462 = vld [vmem:[#allocation4 + $0x10] sm:$0xff]
    %v463 = vld [vmem:[#allocation4 + $0x18] sm:$0xff]
    %464 = vmatprep.subr.mxu0 %v395
    %465 = vmatpush1.msra.mxu0 %v394
    %466 = vmatprep.subr.mxu0 %v399
    %467 = vmatpush1.msra.mxu0 %v398
    %468 = vmatprep.subr.mxu0 %v403
    %469 = vmatpush1.msra.mxu0 %v402
    %470 = vmatprep.subr.mxu0 %v407
    %471 = vmatpush1.msra.mxu0 %v406
    %472 = vmatprep.subr.mxu0 %v411
    %473 = vmatpush1.msra.mxu0 %v410
    %474 = vmatprep.subr.mxu0 %v415
    %475 = vmatpush1.msra.mxu0 %v414
    %476 = vmatprep.subr.mxu0 %v419
    %477 = vmatpush1.msra.mxu0 %v418
    %478 = vmatprep.subr.mxu0 %v423
    %479 = vmatpush1.msra.mxu0 %v422
    %480 = vmatprep.subr.mxu0 %v427
    %481 = vmatpush1.msra.mxu0 %v426
    %482 = vmatprep.subr.mxu0 %v431
    %483 = vmatpush1.msra.mxu0 %v430
    %484 = vmatprep.subr.mxu0 %v435
    %485 = vmatpush1.msra.mxu0 %v434
    %486 = vmatprep.subr.mxu0 %v439
    %487 = vmatpush1.msra.mxu0 %v438
    %488 = vmatprep.subr.mxu0 %v443
    %489 = vmatpush1.msra.mxu0 %v442
    %490 = vmatprep.subr.mxu0 %v447
    %491 = vmatpush1.msra.mxu0 %v446
    %492 = vmatprep.subr.mxu0 %v451
    %493 = vmatpush1.msra.mxu0 %v450
    %494 = vmatprep.subr.mxu0 %v455
    %495 = vmatpush1.msra.mxu0 %v454
    %496 = vmatprep.subr.mxu0 0.0
    %497 = vmatpush1.msra.mxu0 0.0
    %498 = vmatprep.subr.mxu0 0.0
    %499 = vmatpush1.msra.mxu0 0.0
    %500 = vmatprep.subr.mxu0 0.0
    %501 = vmatpush1.msra.mxu0 0.0
    %502 = vmatprep.subr.mxu0 0.0
    %503 = vmatpush1.msra.mxu0 0.0
    %504 = vmatprep.subr.mxu0 0.0
    %505 = vmatpush1.msra.mxu0 0.0
    %506 = vmatprep.subr.mxu0 0.0
    %507 = vmatpush1.msra.mxu0 0.0
    %508 = vmatprep.subr.mxu0 0.0
    %509 = vmatpush1.msra.mxu0 0.0
    %510 = vmatprep.subr.mxu0 0.0
    %511 = vmatpush1.msra.mxu0 0.0
    %512 = vmatprep.subr.mxu0 0.0
    %513 = vmatpush1.msra.mxu0 0.0
    %514 = vmatprep.subr.mxu0 0.0
    %515 = vmatpush1.msra.mxu0 0.0
    %516 = vmatprep.subr.mxu0 0.0
    %517 = vmatpush1.msra.mxu0 0.0
    %518 = vmatprep.subr.mxu0 0.0
    %519 = vmatpush1.msra.mxu0 0.0
    %520 = vmatprep.subr.mxu0 0.0
    %521 = vmatpush1.msra.mxu0 0.0
    %522 = vmatprep.subr.mxu0 0.0
    %523 = vmatpush1.msra.mxu0 0.0
    %524 = vmatprep.subr.mxu0 0.0
    %525 = vmatpush1.msra.mxu0 0.0
    %526 = vmatprep.subr.mxu0 0.0
    %527 = vmatpush1.msra.mxu0 0.0
    %528 = vmatprep.mubr.f32.mxu0 0.0
    %529 = vmatmul.mubr.f32.gmra.mrb[0].mxu0 %v458
    %v530 = vpop.f32.mrb[0].mxu0
    %v531 = vadd.f32 0.0, %v530
    %v532 = vpop.f32.mrb[0].mxu0
    %v533 = vadd.f32 0.0, %v532
    %534 = vdwg.mxu0
    %535 = vmatprep.subr.mxu0 %v397
    %536 = vmatpush1.msra.mxu0 %v396
    %537 = vmatprep.subr.mxu0 %v401
    %538 = vmatpush1.msra.mxu0 %v400
    %539 = vmatprep.subr.mxu0 %v405
    %540 = vmatpush1.msra.mxu0 %v404
    %541 = vmatprep.subr.mxu0 %v409
    %542 = vmatpush1.msra.mxu0 %v408
    %543 = vmatprep.subr.mxu0 %v413
    %544 = vmatpush1.msra.mxu0 %v412
    %545 = vmatprep.subr.mxu0 %v417
    %546 = vmatpush1.msra.mxu0 %v416
    %547 = vmatprep.subr.mxu0 %v421
    %548 = vmatpush1.msra.mxu0 %v420
    %549 = vmatprep.subr.mxu0 %v425
    %550 = vmatpush1.msra.mxu0 %v424
    %551 = vmatprep.subr.mxu0 %v429
    %552 = vmatpush1.msra.mxu0 %v428
    %553 = vmatprep.subr.mxu0 %v433
    %554 = vmatpush1.msra.mxu0 %v432
    %555 = vmatprep.subr.mxu0 %v437
    %556 = vmatpush1.msra.mxu0 %v436
    %557 = vmatprep.subr.mxu0 %v441
    %558 = vmatpush1.msra.mxu0 %v440
    %559 = vmatprep.subr.mxu0 %v445
    %560 = vmatpush1.msra.mxu0 %v444
    %561 = vmatprep.subr.mxu0 %v449
    %562 = vmatpush1.msra.mxu0 %v448
    %563 = vmatprep.subr.mxu0 %v453
    %564 = vmatpush1.msra.mxu0 %v452
    %565 = vmatprep.subr.mxu0 %v457
    %566 = vmatpush1.msra.mxu0 %v456
    %567 = vmatprep.subr.mxu0 0.0
    %568 = vmatpush1.msra.mxu0 0.0
    %569 = vmatprep.subr.mxu0 0.0
    %570 = vmatpush1.msra.mxu0 0.0
    %571 = vmatprep.subr.mxu0 0.0
    %572 = vmatpush1.msra.mxu0 0.0
    %573 = vmatprep.subr.mxu0 0.0
    %574 = vmatpush1.msra.mxu0 0.0
    %575 = vmatprep.subr.mxu0 0.0
    %576 = vmatpush1.msra.mxu0 0.0
    %577 = vmatprep.subr.mxu0 0.0
    %578 = vmatpush1.msra.mxu0 0.0
    %579 = vmatprep.subr.mxu0 0.0
    %580 = vmatpush1.msra.mxu0 0.0
    %581 = vmatprep.subr.mxu0 0.0
    %582 = vmatpush1.msra.mxu0 0.0
    %583 = vmatprep.subr.mxu0 0.0
    %584 = vmatpush1.msra.mxu0 0.0
    %585 = vmatprep.subr.mxu0 0.0
    %586 = vmatpush1.msra.mxu0 0.0
    %587 = vmatprep.subr.mxu0 0.0
    %588 = vmatpush1.msra.mxu0 0.0
    %589 = vmatprep.subr.mxu0 0.0
    %590 = vmatpush1.msra.mxu0 0.0
    %591 = vmatprep.subr.mxu0 0.0
    %592 = vmatpush1.msra.mxu0 0.0
    %593 = vmatprep.subr.mxu0 0.0
    %594 = vmatpush1.msra.mxu0 0.0
    %595 = vmatprep.subr.mxu0 0.0
    %596 = vmatpush1.msra.mxu0 0.0
    %597 = vmatprep.subr.mxu0 0.0
    %598 = vmatpush1.msra.mxu0 0.0
    %599 = vmatprep.mubr.f32.mxu0 0.0
    %600 = vmatmul.mubr.f32.gmra.mrb[0].mxu0 %v458
    %v601 = vpop.f32.mrb[0].mxu0
    %v602 = vadd.f32 0.0, %v601
    %v603 = vpop.f32.mrb[0].mxu0
    %v604 = vadd.f32 0.0, %v603
    %605 = vdwg.mxu0
    %v606 = vadd.f32 %v460, %v531
    %v607 = vadd.f32 %v461, %v533
    %v608 = vadd.f32 %v462, %v602
    %v609 = vadd.f32 %v463, %v604
    %v610 = vxor.u32 %v606, 2147483648
    %v611 = vmul.f32 %v610, 1.442695
    %v612 = vpow.pop %v611
    %v613 = vadd.f32 %v612, 1.0
    %v614 = vrcp.pop %v613
    %v615 = vmul.f32 1.0, %v614
    %v616 = vxor.u32 %v607, 2147483648
    %v617 = vmul.f32 %v616, 1.442695
    %v618 = vpow.pop %v617
    %v619 = vadd.f32 %v618, 1.0
    %v620 = vrcp.pop %v619
    %v621 = vmul.f32 1.0, %v620
    %v622 = vtanh.pop %v608
    %v623 = vxor.u32 %v609, 2147483648
    %v624 = vmul.f32 %v623, 1.442695
    %v625 = vpow.pop %v624
    %v626 = vadd.f32 %v625, 1.0
    %v627 = vrcp.pop %v626
    %v628 = vmul.f32 1.0, %v627
    %v629 = vmul.f32 %v621, %v459
    %v630 = vmul.f32 %v615, %v622
    %v631 = vadd.f32 %v629, %v630
    %v632 = vtanh.pop %v631
    %v633 = vmul.f32 %v628, %v632
    %634 = vst [vmem:[#allocation11] sm:$0xff] %v633
    %s635 = scalar_lea.vmem [#allocation4], 32
    %v636 = vld [vmem:[%s635] sm:$0xff]
    %v637 = vld [vmem:[%s635 + $0x8] sm:$0xff]
    %v638 = vld [vmem:[%s635 + $0x10] sm:$0xff]
    %v639 = vld [vmem:[%s635 + $0x18] sm:$0xff]
    %640 = vmatprep.subr.mxu0 %v395
    %641 = vmatpush1.msra.mxu0 %v394
    %642 = vmatprep.subr.mxu0 %v399
    %643 = vmatpush1.msra.mxu0 %v398
    %644 = vmatprep.subr.mxu0 %v403
    %645 = vmatpush1.msra.mxu0 %v402
    %646 = vmatprep.subr.mxu0 %v407
    %647 = vmatpush1.msra.mxu0 %v406
    %648 = vmatprep.subr.mxu0 %v411
    %649 = vmatpush1.msra.mxu0 %v410
    %650 = vmatprep.subr.mxu0 %v415
    %651 = vmatpush1.msra.mxu0 %v414
    %652 = vmatprep.subr.mxu0 %v419
    %653 = vmatpush1.msra.mxu0 %v418
    %654 = vmatprep.subr.mxu0 %v423
    %655 = vmatpush1.msra.mxu0 %v422
    %656 = vmatprep.subr.mxu0 %v427
    %657 = vmatpush1.msra.mxu0 %v426
    %658 = vmatprep.subr.mxu0 %v431
    %659 = vmatpush1.msra.mxu0 %v430
    %660 = vmatprep.subr.mxu0 %v435
    %661 = vmatpush1.msra.mxu0 %v434
    %662 = vmatprep.subr.mxu0 %v439
    %663 = vmatpush1.msra.mxu0 %v438
    %664 = vmatprep.subr.mxu0 %v443
    %665 = vmatpush1.msra.mxu0 %v442
    %666 = vmatprep.subr.mxu0 %v447
    %667 = vmatpush1.msra.mxu0 %v446
    %668 = vmatprep.subr.mxu0 %v451
    %669 = vmatpush1.msra.mxu0 %v450
    %670 = vmatprep.subr.mxu0 %v455
    %671 = vmatpush1.msra.mxu0 %v454
    %672 = vmatprep.subr.mxu0 0.0
    %673 = vmatpush1.msra.mxu0 0.0
    %674 = vmatprep.subr.mxu0 0.0
    %675 = vmatpush1.msra.mxu0 0.0
    %676 = vmatprep.subr.mxu0 0.0
    %677 = vmatpush1.msra.mxu0 0.0
    %678 = vmatprep.subr.mxu0 0.0
    %679 = vmatpush1.msra.mxu0 0.0
    %680 = vmatprep.subr.mxu0 0.0
    %681 = vmatpush1.msra.mxu0 0.0
    %682 = vmatprep.subr.mxu0 0.0
    %683 = vmatpush1.msra.mxu0 0.0
    %684 = vmatprep.subr.mxu0 0.0
    %685 = vmatpush1.msra.mxu0 0.0
    %686 = vmatprep.subr.mxu0 0.0
    %687 = vmatpush1.msra.mxu0 0.0
    %688 = vmatprep.subr.mxu0 0.0
    %689 = vmatpush1.msra.mxu0 0.0
    %690 = vmatprep.subr.mxu0 0.0
    %691 = vmatpush1.msra.mxu0 0.0
    %692 = vmatprep.subr.mxu0 0.0
    %693 = vmatpush1.msra.mxu0 0.0
    %694 = vmatprep.subr.mxu0 0.0
    %695 = vmatpush1.msra.mxu0 0.0
    %696 = vmatprep.subr.mxu0 0.0
    %697 = vmatpush1.msra.mxu0 0.0
    %698 = vmatprep.subr.mxu0 0.0
    %699 = vmatpush1.msra.mxu0 0.0
    %700 = vmatprep.subr.mxu0 0.0
    %701 = vmatpush1.msra.mxu0 0.0
    %702 = vmatprep.subr.mxu0 0.0
    %703 = vmatpush1.msra.mxu0 0.0
    %704 = vmatprep.mubr.f32.mxu0 0.0
    %705 = vmatmul.mubr.f32.gmra.mrb[0].mxu0 %v633
    %v706 = vpop.f32.mrb[0].mxu0
    %v707 = vadd.f32 0.0, %v706
    %v708 = vpop.f32.mrb[0].mxu0
    %v709 = vadd.f32 0.0, %v708
    %710 = vdwg.mxu0
    %711 = vmatprep.subr.mxu0 %v397
    %712 = vmatpush1.msra.mxu0 %v396
    %713 = vmatprep.subr.mxu0 %v401
    %714 = vmatpush1.msra.mxu0 %v400
    %715 = vmatprep.subr.mxu0 %v405
    %716 = vmatpush1.msra.mxu0 %v404
    %717 = vmatprep.subr.mxu0 %v409
    %718 = vmatpush1.msra.mxu0 %v408
    %719 = vmatprep.subr.mxu0 %v413
    %720 = vmatpush1.msra.mxu0 %v412
    %721 = vmatprep.subr.mxu0 %v417
    %722 = vmatpush1.msra.mxu0 %v416
    %723 = vmatprep.subr.mxu0 %v421
    %724 = vmatpush1.msra.mxu0 %v420
    %725 = vmatprep.subr.mxu0 %v425
    %726 = vmatpush1.msra.mxu0 %v424
    %727 = vmatprep.subr.mxu0 %v429
    %728 = vmatpush1.msra.mxu0 %v428
    %729 = vmatprep.subr.mxu0 %v433
    %730 = vmatpush1.msra.mxu0 %v432
    %731 = vmatprep.subr.mxu0 %v437
    %732 = vmatpush1.msra.mxu0 %v436
    %733 = vmatprep.subr.mxu0 %v441
    %734 = vmatpush1.msra.mxu0 %v440
    %735 = vmatprep.subr.mxu0 %v445
    %736 = vmatpush1.msra.mxu0 %v444
    %737 = vmatprep.subr.mxu0 %v449
    %738 = vmatpush1.msra.mxu0 %v448
    %739 = vmatprep.subr.mxu0 %v453
    %740 = vmatpush1.msra.mxu0 %v452
    %741 = vmatprep.subr.mxu0 %v457
    %742 = vmatpush1.msra.mxu0 %v456
    %743 = vmatprep.subr.mxu0 0.0
    %744 = vmatpush1.msra.mxu0 0.0
    %745 = vmatprep.subr.mxu0 0.0
    %746 = vmatpush1.msra.mxu0 0.0
    %747 = vmatprep.subr.mxu0 0.0
    %748 = vmatpush1.msra.mxu0 0.0
    %749 = vmatprep.subr.mxu0 0.0
    %750 = vmatpush1.msra.mxu0 0.0
    %751 = vmatprep.subr.mxu0 0.0
    %752 = vmatpush1.msra.mxu0 0.0
    %753 = vmatprep.subr.mxu0 0.0
    %754 = vmatpush1.msra.mxu0 0.0
    %755 = vmatprep.subr.mxu0 0.0
    %756 = vmatpush1.msra.mxu0 0.0
    %757 = vmatprep.subr.mxu0 0.0
    %758 = vmatpush1.msra.mxu0 0.0
    %759 = vmatprep.subr.mxu0 0.0
    %760 = vmatpush1.msra.mxu0 0.0
    %761 = vmatprep.subr.mxu0 0.0
    %762 = vmatpush1.msra.mxu0 0.0
    %763 = vmatprep.subr.mxu0 0.0
    %764 = vmatpush1.msra.mxu0 0.0
    %765 = vmatprep.subr.mxu0 0.0
    %766 = vmatpush1.msra.mxu0 0.0
    %767 = vmatprep.subr.mxu0 0.0
    %768 = vmatpush1.msra.mxu0 0.0
    %769 = vmatprep.subr.mxu0 0.0
    %770 = vmatpush1.msra.mxu0 0.0
    %771 = vmatprep.subr.mxu0 0.0
    %772 = vmatpush1.msra.mxu0 0.0
    %773 = vmatprep.subr.mxu0 0.0
    %774 = vmatpush1.msra.mxu0 0.0
    %775 = vmatprep.mubr.f32.mxu0 0.0
    %776 = vmatmul.mubr.f32.gmra.mrb[0].mxu0 %v633
    %v777 = vpop.f32.mrb[0].mxu0
    %v778 = vadd.f32 0.0, %v777
    %v779 = vpop.f32.mrb[0].mxu0
    %v780 = vadd.f32 0.0, %v779
    %781 = vdwg.mxu0
    %v782 = vadd.f32 %v636, %v707
    %v783 = vadd.f32 %v637, %v709
    %v784 = vadd.f32 %v638, %v778
    %v785 = vadd.f32 %v639, %v780
    %v786 = vxor.u32 %v782, 2147483648
    %v787 = vmul.f32 %v786, 1.442695
    %v788 = vpow.pop %v787
    %v789 = vadd.f32 %v788, 1.0
    %v790 = vrcp.pop %v789
    %v791 = vmul.f32 1.0, %v790
    %v792 = vxor.u32 %v783, 2147483648
    %v793 = vmul.f32 %v792, 1.442695
    %v794 = vpow.pop %v793
    %v795 = vadd.f32 %v794, 1.0
    %v796 = vrcp.pop %v795
    %v797 = vmul.f32 1.0, %v796
    %v798 = vtanh.pop %v784
    %v799 = vxor.u32 %v785, 2147483648
    %v800 = vmul.f32 %v799, 1.442695
    %v801 = vpow.pop %v800
    %v802 = vadd.f32 %v801, 1.0
    %v803 = vrcp.pop %v802
    %v804 = vmul.f32 1.0, %v803
    %v805 = vmul.f32 %v797, %v631
    %v806 = vmul.f32 %v791, %v798
    %v807 = vadd.f32 %v805, %v806
    %v808 = vtanh.pop %v807
    %v809 = vmul.f32 %v804, %v808
    %s810 = scalar_lea.vmem [#allocation11], 8
    %811 = vst [vmem:[%s810] sm:$0xff] %v809
    %s812 = scalar_lea.vmem [#allocation4], 64
    %v813 = vld [vmem:[%s812] sm:$0xff]
    %v814 = vld [vmem:[%s812 + $0x8] sm:$0xff]
    %v815 = vld [vmem:[%s812 + $0x10] sm:$0xff]
    %v816 = vld [vmem:[%s812 + $0x18] sm:$0xff]
    %817 = vmatprep.subr.mxu0 %v395
    %818 = vmatpush1.msra.mxu0 %v394
    %819 = vmatprep.subr.mxu0 %v399
    %820 = vmatpush1.msra.mxu0 %v398
    %821 = vmatprep.subr.mxu0 %v403
    %822 = vmatpush1.msra.mxu0 %v402
    %823 = vmatprep.subr.mxu0 %v407
    %824 = vmatpush1.msra.mxu0 %v406
    %825 = vmatprep.subr.mxu0 %v411
    %826 = vmatpush1.msra.mxu0 %v410
    %827 = vmatprep.subr.mxu0 %v415
    %828 = vmatpush1.msra.mxu0 %v414
    %829 = vmatprep.subr.mxu0 %v419
    %830 = vmatpush1.msra.mxu0 %v418
    %831 = vmatprep.subr.mxu0 %v423
    %832 = vmatpush1.msra.mxu0 %v422
    %833 = vmatprep.subr.mxu0 %v427
    %834 = vmatpush1.msra.mxu0 %v426
    %835 = vmatprep.subr.mxu0 %v431
    %836 = vmatpush1.msra.mxu0 %v430
    %837 = vmatprep.subr.mxu0 %v435
    %838 = vmatpush1.msra.mxu0 %v434
    %839 = vmatprep.subr.mxu0 %v439
    %840 = vmatpush1.msra.mxu0 %v438
    %841 = vmatprep.subr.mxu0 %v443
    %842 = vmatpush1.msra.mxu0 %v442
    %843 = vmatprep.subr.mxu0 %v447
    %844 = vmatpush1.msra.mxu0 %v446
    %845 = vmatprep.subr.mxu0 %v451
    %846 = vmatpush1.msra.mxu0 %v450
    %847 = vmatprep.subr.mxu0 %v455
    %848 = vmatpush1.msra.mxu0 %v454
    %849 = vmatprep.subr.mxu0 0.0
    %850 = vmatpush1.msra.mxu0 0.0
    %851 = vmatprep.subr.mxu0 0.0
    %852 = vmatpush1.msra.mxu0 0.0
    %853 = vmatprep.subr.mxu0 0.0
    %854 = vmatpush1.msra.mxu0 0.0
    %855 = vmatprep.subr.mxu0 0.0
    %856 = vmatpush1.msra.mxu0 0.0
    %857 = vmatprep.subr.mxu0 0.0
    %858 = vmatpush1.msra.mxu0 0.0
    %859 = vmatprep.subr.mxu0 0.0
    %860 = vmatpush1.msra.mxu0 0.0
    %861 = vmatprep.subr.mxu0 0.0
    %862 = vmatpush1.msra.mxu0 0.0
    %863 = vmatprep.subr.mxu0 0.0
    %864 = vmatpush1.msra.mxu0 0.0
    %865 = vmatprep.subr.mxu0 0.0
    %866 = vmatpush1.msra.mxu0 0.0
    %867 = vmatprep.subr.mxu0 0.0
    %868 = vmatpush1.msra.mxu0 0.0
    %869 = vmatprep.subr.mxu0 0.0
    %870 = vmatpush1.msra.mxu0 0.0
    %871 = vmatprep.subr.mxu0 0.0
    %872 = vmatpush1.msra.mxu0 0.0
    %873 = vmatprep.subr.mxu0 0.0
    %874 = vmatpush1.msra.mxu0 0.0
    %875 = vmatprep.subr.mxu0 0.0
    %876 = vmatpush1.msra.mxu0 0.0
    %877 = vmatprep.subr.mxu0 0.0
    %878 = vmatpush1.msra.mxu0 0.0
    %879 = vmatprep.subr.mxu0 0.0
    %880 = vmatpush1.msra.mxu0 0.0
    %881 = vmatprep.mubr.f32.mxu0 0.0
    %882 = vmatmul.mubr.f32.gmra.mrb[0].mxu0 %v809
    %v883 = vpop.f32.mrb[0].mxu0
    %v884 = vadd.f32 0.0, %v883
    %v885 = vpop.f32.mrb[0].mxu0
    %v886 = vadd.f32 0.0, %v885
    %887 = vdwg.mxu0
    %888 = vmatprep.subr.mxu0 %v397
    %889 = vmatpush1.msra.mxu0 %v396
    %890 = vmatprep.subr.mxu0 %v401
    %891 = vmatpush1.msra.mxu0 %v400
    %892 = vmatprep.subr.mxu0 %v405
    %893 = vmatpush1.msra.mxu0 %v404
    %894 = vmatprep.subr.mxu0 %v409
    %895 = vmatpush1.msra.mxu0 %v408
    %896 = vmatprep.subr.mxu0 %v413
    %897 = vmatpush1.msra.mxu0 %v412
    %898 = vmatprep.subr.mxu0 %v417
    %899 = vmatpush1.msra.mxu0 %v416
    %900 = vmatprep.subr.mxu0 %v421
    %901 = vmatpush1.msra.mxu0 %v420
    %902 = vmatprep.subr.mxu0 %v425
    %903 = vmatpush1.msra.mxu0 %v424
    %904 = vmatprep.subr.mxu0 %v429
    %905 = vmatpush1.msra.mxu0 %v428
    %906 = vmatprep.subr.mxu0 %v433
    %907 = vmatpush1.msra.mxu0 %v432
    %908 = vmatprep.subr.mxu0 %v437
    %909 = vmatpush1.msra.mxu0 %v436
    %910 = vmatprep.subr.mxu0 %v441
    %911 = vmatpush1.msra.mxu0 %v440
    %912 = vmatprep.subr.mxu0 %v445
    %913 = vmatpush1.msra.mxu0 %v444
    %914 = vmatprep.subr.mxu0 %v449
    %915 = vmatpush1.msra.mxu0 %v448
    %916 = vmatprep.subr.mxu0 %v453
    %917 = vmatpush1.msra.mxu0 %v452
    %918 = vmatprep.subr.mxu0 %v457
    %919 = vmatpush1.msra.mxu0 %v456
    %920 = vmatprep.subr.mxu0 0.0
    %921 = vmatpush1.msra.mxu0 0.0
    %922 = vmatprep.subr.mxu0 0.0
    %923 = vmatpush1.msra.mxu0 0.0
    %924 = vmatprep.subr.mxu0 0.0
    %925 = vmatpush1.msra.mxu0 0.0
    %926 = vmatprep.subr.mxu0 0.0
    %927 = vmatpush1.msra.mxu0 0.0
    %928 = vmatprep.subr.mxu0 0.0
    %929 = vmatpush1.msra.mxu0 0.0
    %930 = vmatprep.subr.mxu0 0.0
    %931 = vmatpush1.msra.mxu0 0.0
    %932 = vmatprep.subr.mxu0 0.0
    %933 = vmatpush1.msra.mxu0 0.0
    %934 = vmatprep.subr.mxu0 0.0
    %935 = vmatpush1.msra.mxu0 0.0
    %936 = vmatprep.subr.mxu0 0.0
    %937 = vmatpush1.msra.mxu0 0.0
    %938 = vmatprep.subr.mxu0 0.0
    %939 = vmatpush1.msra.mxu0 0.0
    %940 = vmatprep.subr.mxu0 0.0
    %941 = vmatpush1.msra.mxu0 0.0
    %942 = vmatprep.subr.mxu0 0.0
    %943 = vmatpush1.msra.mxu0 0.0
    %944 = vmatprep.subr.mxu0 0.0
    %945 = vmatpush1.msra.mxu0 0.0
    %946 = vmatprep.subr.mxu0 0.0
    %947 = vmatpush1.msra.mxu0 0.0
    %948 = vmatprep.subr.mxu0 0.0
    %949 = vmatpush1.msra.mxu0 0.0
    %950 = vmatprep.subr.mxu0 0.0
    %951 = vmatpush1.msra.mxu0 0.0
    %952 = vmatprep.mubr.f32.mxu0 0.0
    %953 = vmatmul.mubr.f32.gmra.mrb[0].mxu0 %v809
    %v954 = vpop.f32.mrb[0].mxu0
    %v955 = vadd.f32 0.0, %v954
    %v956 = vpop.f32.mrb[0].mxu0
    %v957 = vadd.f32 0.0, %v956
    %958 = vdwg.mxu0
    %v959 = vadd.f32 %v813, %v884
    %v960 = vadd.f32 %v814, %v886
    %v961 = vadd.f32 %v815, %v955
    %v962 = vadd.f32 %v816, %v957
    %v963 = vxor.u32 %v959, 2147483648
    %v964 = vmul.f32 %v963, 1.442695
    %v965 = vpow.pop %v964
    %v966 = vadd.f32 %v965, 1.0
    %v967 = vrcp.pop %v966
    %v968 = vmul.f32 1.0, %v967
    %v969 = vxor.u32 %v960, 2147483648
    %v970 = vmul.f32 %v969, 1.442695
    %v971 = vpow.pop %v970
    %v972 = vadd.f32 %v971, 1.0
    %v973 = vrcp.pop %v972
    %v974 = vmul.f32 1.0, %v973
    %v975 = vtanh.pop %v961
    %v976 = vxor.u32 %v962, 2147483648
    %v977 = vmul.f32 %v976, 1.442695
    %v978 = vpow.pop %v977
    %v979 = vadd.f32 %v978, 1.0
    %v980 = vrcp.pop %v979
    %v981 = vmul.f32 1.0, %v980
    %v982 = vmul.f32 %v974, %v807
    %v983 = vmul.f32 %v968, %v975
    %v984 = vadd.f32 %v982, %v983
    %v985 = vtanh.pop %v984
    %v986 = vmul.f32 %v981, %v985
    %s987 = scalar_lea.vmem [#allocation11], 16
    %988 = vst [vmem:[%s987] sm:$0xff] %v986
    %s989 = scalar_lea.vmem [#allocation4], 96
    %v990 = vld [vmem:[%s989] sm:$0xff]
    %v991 = vld [vmem:[%s989 + $0x8] sm:$0xff]
    %v992 = vld [vmem:[%s989 + $0x10] sm:$0xff]
    %v993 = vld [vmem:[%s989 + $0x18] sm:$0xff]
    %994 = vmatprep.subr.mxu0 %v395
    %995 = vmatpush1.msra.mxu0 %v394
    %996 = vmatprep.subr.mxu0 %v399
    %997 = vmatpush1.msra.mxu0 %v398
    %998 = vmatprep.subr.mxu0 %v403
    %999 = vmatpush1.msra.mxu0 %v402
    %1000 = vmatprep.subr.mxu0 %v407
    %1001 = vmatpush1.msra.mxu0 %v406
    %1002 = vmatprep.subr.mxu0 %v411
    %1003 = vmatpush1.msra.mxu0 %v410
    %1004 = vmatprep.subr.mxu0 %v415
    %1005 = vmatpush1.msra.mxu0 %v414
    %1006 = vmatprep.subr.mxu0 %v419
    %1007 = vmatpush1.msra.mxu0 %v418
    %1008 = vmatprep.subr.mxu0 %v423
    %1009 = vmatpush1.msra.mxu0 %v422
    %1010 = vmatprep.subr.mxu0 %v427
    %1011 = vmatpush1.msra.mxu0 %v426
    %1012 = vmatprep.subr.mxu0 %v431
    %1013 = vmatpush1.msra.mxu0 %v430
    %1014 = vmatprep.subr.mxu0 %v435
    %1015 = vmatpush1.msra.mxu0 %v434
    %1016 = vmatprep.subr.mxu0 %v439
    %1017 = vmatpush1.msra.mxu0 %v438
    %1018 = vmatprep.subr.mxu0 %v443
    %1019 = vmatpush1.msra.mxu0 %v442
    %1020 = vmatprep.subr.mxu0 %v447
    %1021 = vmatpush1.msra.mxu0 %v446
    %1022 = vmatprep.subr.mxu0 %v451
    %1023 = vmatpush1.msra.mxu0 %v450
    %1024 = vmatprep.subr.mxu0 %v455
    %1025 = vmatpush1.msra.mxu0 %v454
    %1026 = vmatprep.subr.mxu0 0.0
    %1027 = vmatpush1.msra.mxu0 0.0
    %1028 = vmatprep.subr.mxu0 0.0
    %1029 = vmatpush1.msra.mxu0 0.0
    %1030 = vmatprep.subr.mxu0 0.0
    %1031 = vmatpush1.msra.mxu0 0.0
    %1032 = vmatprep.subr.mxu0 0.0
    %1033 = vmatpush1.msra.mxu0 0.0
    %1034 = vmatprep.subr.mxu0 0.0
    %1035 = vmatpush1.msra.mxu0 0.0
    %1036 = vmatprep.subr.mxu0 0.0
    %1037 = vmatpush1.msra.mxu0 0.0
    %1038 = vmatprep.subr.mxu0 0.0
    %1039 = vmatpush1.msra.mxu0 0.0
    %1040 = vmatprep.subr.mxu0 0.0
    %1041 = vmatpush1.msra.mxu0 0.0
    %1042 = vmatprep.subr.mxu0 0.0
    %1043 = vmatpush1.msra.mxu0 0.0
    %1044 = vmatprep.subr.mxu0 0.0
    %1045 = vmatpush1.msra.mxu0 0.0
    %1046 = vmatprep.subr.mxu0 0.0
    %1047 = vmatpush1.msra.mxu0 0.0
    %1048 = vmatprep.subr.mxu0 0.0
    %1049 = vmatpush1.msra.mxu0 0.0
    %1050 = vmatprep.subr.mxu0 0.0
    %1051 = vmatpush1.msra.mxu0 0.0
    %1052 = vmatprep.subr.mxu0 0.0
    %1053 = vmatpush1.msra.mxu0 0.0
    %1054 = vmatprep.subr.mxu0 0.0
    %1055 = vmatpush1.msra.mxu0 0.0
    %1056 = vmatprep.subr.mxu0 0.0
    %1057 = vmatpush1.msra.mxu0 0.0
    %1058 = vmatprep.mubr.f32.mxu0 0.0
    %1059 = vmatmul.mubr.f32.gmra.mrb[0].mxu0 %v986
    %v1060 = vpop.f32.mrb[0].mxu0
    %v1061 = vadd.f32 0.0, %v1060
    %v1062 = vpop.f32.mrb[0].mxu0
    %v1063 = vadd.f32 0.0, %v1062
    %1064 = vdwg.mxu0
    %1065 = vmatprep.subr.mxu0 %v397
    %1066 = vmatpush1.msra.mxu0 %v396
    %1067 = vmatprep.subr.mxu0 %v401
    %1068 = vmatpush1.msra.mxu0 %v400
    %1069 = vmatprep.subr.mxu0 %v405
    %1070 = vmatpush1.msra.mxu0 %v404
    %1071 = vmatprep.subr.mxu0 %v409
    %1072 = vmatpush1.msra.mxu0 %v408
    %1073 = vmatprep.subr.mxu0 %v413
    %1074 = vmatpush1.msra.mxu0 %v412
    %1075 = vmatprep.subr.mxu0 %v417
    %1076 = vmatpush1.msra.mxu0 %v416
    %1077 = vmatprep.subr.mxu0 %v421
    %1078 = vmatpush1.msra.mxu0 %v420
    %1079 = vmatprep.subr.mxu0 %v425
    %1080 = vmatpush1.msra.mxu0 %v424
    %1081 = vmatprep.subr.mxu0 %v429
    %1082 = vmatpush1.msra.mxu0 %v428
    %1083 = vmatprep.subr.mxu0 %v433
    %1084 = vmatpush1.msra.mxu0 %v432
    %1085 = vmatprep.subr.mxu0 %v437
    %1086 = vmatpush1.msra.mxu0 %v436
    %1087 = vmatprep.subr.mxu0 %v441
    %1088 = vmatpush1.msra.mxu0 %v440
    %1089 = vmatprep.subr.mxu0 %v445
    %1090 = vmatpush1.msra.mxu0 %v444
    %1091 = vmatprep.subr.mxu0 %v449
    %1092 = vmatpush1.msra.mxu0 %v448
    %1093 = vmatprep.subr.mxu0 %v453
    %1094 = vmatpush1.msra.mxu0 %v452
    %1095 = vmatprep.subr.mxu0 %v457
    %1096 = vmatpush1.msra.mxu0 %v456
    %1097 = vmatprep.subr.mxu0 0.0
    %1098 = vmatpush1.msra.mxu0 0.0
    %1099 = vmatprep.subr.mxu0 0.0
    %1100 = vmatpush1.msra.mxu0 0.0
    %1101 = vmatprep.subr.mxu0 0.0
    %1102 = vmatpush1.msra.mxu0 0.0
    %1103 = vmatprep.subr.mxu0 0.0
    %1104 = vmatpush1.msra.mxu0 0.0
    %1105 = vmatprep.subr.mxu0 0.0
    %1106 = vmatpush1.msra.mxu0 0.0
    %1107 = vmatprep.subr.mxu0 0.0
    %1108 = vmatpush1.msra.mxu0 0.0
    %1109 = vmatprep.subr.mxu0 0.0
    %1110 = vmatpush1.msra.mxu0 0.0
    %1111 = vmatprep.subr.mxu0 0.0
    %1112 = vmatpush1.msra.mxu0 0.0
    %1113 = vmatprep.subr.mxu0 0.0
    %1114 = vmatpush1.msra.mxu0 0.0
    %1115 = vmatprep.subr.mxu0 0.0
    %1116 = vmatpush1.msra.mxu0 0.0
    %1117 = vmatprep.subr.mxu0 0.0
    %1118 = vmatpush1.msra.mxu0 0.0
    %1119 = vmatprep.subr.mxu0 0.0
    %1120 = vmatpush1.msra.mxu0 0.0
    %1121 = vmatprep.subr.mxu0 0.0
    %1122 = vmatpush1.msra.mxu0 0.0
    %1123 = vmatprep.subr.mxu0 0.0
    %1124 = vmatpush1.msra.mxu0 0.0
    %1125 = vmatprep.subr.mxu0 0.0
    %1126 = vmatpush1.msra.mxu0 0.0
    %1127 = vmatprep.subr.mxu0 0.0
    %1128 = vmatpush1.msra.mxu0 0.0
    %1129 = vmatprep.mubr.f32.mxu0 0.0
    %1130 = vmatmul.mubr.f32.gmra.mrb[0].mxu0 %v986
    %v1131 = vpop.f32.mrb[0].mxu0
    %v1132 = vadd.f32 0.0, %v1131
    %v1133 = vpop.f32.mrb[0].mxu0
    %v1134 = vadd.f32 0.0, %v1133
    %1135 = vdwg.mxu0
    %v1136 = vadd.f32 %v990, %v1061
    %v1137 = vadd.f32 %v991, %v1063
    %v1138 = vadd.f32 %v992, %v1132
    %v1139 = vadd.f32 %v993, %v1134
    %v1140 = vxor.u32 %v1136, 2147483648
    %v1141 = vmul.f32 %v1140, 1.442695
    %v1142 = vpow.pop %v1141
    %v1143 = vadd.f32 %v1142, 1.0
    %v1144 = vrcp.pop %v1143
    %v1145 = vmul.f32 1.0, %v1144
    %v1146 = vxor.u32 %v1137, 2147483648
    %v1147 = vmul.f32 %v1146, 1.442695
    %v1148 = vpow.pop %v1147
    %v1149 = vadd.f32 %v1148, 1.0
    %v1150 = vrcp.pop %v1149
    %v1151 = vmul.f32 1.0, %v1150
    %v1152 = vtanh.pop %v1138
    %v1153 = vxor.u32 %v1139, 2147483648
    %v1154 = vmul.f32 %v1153, 1.442695
    %v1155 = vpow.pop %v1154
    %v1156 = vadd.f32 %v1155, 1.0
    %v1157 = vrcp.pop %v1156
    %v1158 = vmul.f32 1.0, %v1157
    %v1159 = vmul.f32 %v1151, %v984
    %v1160 = vmul.f32 %v1145, %v1152
    %v1161 = vadd.f32 %v1159, %v1160
    %v1162 = vtanh.pop %v1161
    %v1163 = vmul.f32 %v1158, %v1162
    %s1164 = scalar_lea.vmem [#allocation11], 24
    %1165 = vst [vmem:[%s1164] sm:$0xff] %v1163
    %s1166 = scalar_lea.vmem [#allocation4], 128
    %v1167 = vld [vmem:[%s1166] sm:$0xff]
    %v1168 = vld [vmem:[%s1166 + $0x8] sm:$0xff]
    %v1169 = vld [vmem:[%s1166 + $0x10] sm:$0xff]
    %v1170 = vld [vmem:[%s1166 + $0x18] sm:$0xff]
    %1171 = vmatprep.subr.mxu0 %v395
    %1172 = vmatpush1.msra.mxu0 %v394
    %1173 = vmatprep.subr.mxu0 %v399
    %1174 = vmatpush1.msra.mxu0 %v398
    %1175 = vmatprep.subr.mxu0 %v403
    %1176 = vmatpush1.msra.mxu0 %v402
    %1177 = vmatprep.subr.mxu0 %v407
    %1178 = vmatpush1.msra.mxu0 %v406
    %1179 = vmatprep.subr.mxu0 %v411
    %1180 = vmatpush1.msra.mxu0 %v410
    %1181 = vmatprep.subr.mxu0 %v415
    %1182 = vmatpush1.msra.mxu0 %v414
    %1183 = vmatprep.subr.mxu0 %v419
    %1184 = vmatpush1.msra.mxu0 %v418
    %1185 = vmatprep.subr.mxu0 %v423
    %1186 = vmatpush1.msra.mxu0 %v422
    %1187 = vmatprep.subr.mxu0 %v427
    %1188 = vmatpush1.msra.mxu0 %v426
    %1189 = vmatprep.subr.mxu0 %v431
    %1190 = vmatpush1.msra.mxu0 %v430
    %1191 = vmatprep.subr.mxu0 %v435
    %1192 = vmatpush1.msra.mxu0 %v434
    %1193 = vmatprep.subr.mxu0 %v439
    %1194 = vmatpush1.msra.mxu0 %v438
    %1195 = vmatprep.subr.mxu0 %v443
    %1196 = vmatpush1.msra.mxu0 %v442
    %1197 = vmatprep.subr.mxu0 %v447
    %1198 = vmatpush1.msra.mxu0 %v446
    %1199 = vmatprep.subr.mxu0 %v451
    %1200 = vmatpush1.msra.mxu0 %v450
    %1201 = vmatprep.subr.mxu0 %v455
    %1202 = vmatpush1.msra.mxu0 %v454
    %1203 = vmatprep.subr.mxu0 0.0
    %1204 = vmatpush1.msra.mxu0 0.0
    %1205 = vmatprep.subr.mxu0 0.0
    %1206 = vmatpush1.msra.mxu0 0.0
    %1207 = vmatprep.subr.mxu0 0.0
    %1208 = vmatpush1.msra.mxu0 0.0
    %1209 = vmatprep.subr.mxu0 0.0
    %1210 = vmatpush1.msra.mxu0 0.0
    %1211 = vmatprep.subr.mxu0 0.0
    %1212 = vmatpush1.msra.mxu0 0.0
    %1213 = vmatprep.subr.mxu0 0.0
    %1214 = vmatpush1.msra.mxu0 0.0
    %1215 = vmatprep.subr.mxu0 0.0
    %1216 = vmatpush1.msra.mxu0 0.0
    %1217 = vmatprep.subr.mxu0 0.0
    %1218 = vmatpush1.msra.mxu0 0.0
    %1219 = vmatprep.subr.mxu0 0.0
    %1220 = vmatpush1.msra.mxu0 0.0
    %1221 = vmatprep.subr.mxu0 0.0
    %1222 = vmatpush1.msra.mxu0 0.0
    %1223 = vmatprep.subr.mxu0 0.0
    %1224 = vmatpush1.msra.mxu0 0.0
    %1225 = vmatprep.subr.mxu0 0.0
    %1226 = vmatpush1.msra.mxu0 0.0
    %1227 = vmatprep.subr.mxu0 0.0
    %1228 = vmatpush1.msra.mxu0 0.0
    %1229 = vmatprep.subr.mxu0 0.0
    %1230 = vmatpush1.msra.mxu0 0.0
    %1231 = vmatprep.subr.mxu0 0.0
    %1232 = vmatpush1.msra.mxu0 0.0
    %1233 = vmatprep.subr.mxu0 0.0
    %1234 = vmatpush1.msra.mxu0 0.0
    %1235 = vmatprep.mubr.f32.mxu0 0.0
    %1236 = vmatmul.mubr.f32.gmra.mrb[0].mxu0 %v1163
    %v1237 = vpop.f32.mrb[0].mxu0
    %v1238 = vadd.f32 0.0, %v1237
    %v1239 = vpop.f32.mrb[0].mxu0
    %v1240 = vadd.f32 0.0, %v1239
    %1241 = vdwg.mxu0
    %1242 = vmatprep.subr.mxu0 %v397
    %1243 = vmatpush1.msra.mxu0 %v396
    %1244 = vmatprep.subr.mxu0 %v401
    %1245 = vmatpush1.msra.mxu0 %v400
    %1246 = vmatprep.subr.mxu0 %v405
    %1247 = vmatpush1.msra.mxu0 %v404
    %1248 = vmatprep.subr.mxu0 %v409
    %1249 = vmatpush1.msra.mxu0 %v408
    %1250 = vmatprep.subr.mxu0 %v413
    %1251 = vmatpush1.msra.mxu0 %v412
    %1252 = vmatprep.subr.mxu0 %v417
    %1253 = vmatpush1.msra.mxu0 %v416
    %1254 = vmatprep.subr.mxu0 %v421
    %1255 = vmatpush1.msra.mxu0 %v420
    %1256 = vmatprep.subr.mxu0 %v425
    %1257 = vmatpush1.msra.mxu0 %v424
    %1258 = vmatprep.subr.mxu0 %v429
    %1259 = vmatpush1.msra.mxu0 %v428
    %1260 = vmatprep.subr.mxu0 %v433
    %1261 = vmatpush1.msra.mxu0 %v432
    %1262 = vmatprep.subr.mxu0 %v437
    %1263 = vmatpush1.msra.mxu0 %v436
    %1264 = vmatprep.subr.mxu0 %v441
    %1265 = vmatpush1.msra.mxu0 %v440
    %1266 = vmatprep.subr.mxu0 %v445
    %1267 = vmatpush1.msra.mxu0 %v444
    %1268 = vmatprep.subr.mxu0 %v449
    %1269 = vmatpush1.msra.mxu0 %v448
    %1270 = vmatprep.subr.mxu0 %v453
    %1271 = vmatpush1.msra.mxu0 %v452
    %1272 = vmatprep.subr.mxu0 %v457
    %1273 = vmatpush1.msra.mxu0 %v456
    %1274 = vmatprep.subr.mxu0 0.0
    %1275 = vmatpush1.msra.mxu0 0.0
    %1276 = vmatprep.subr.mxu0 0.0
    %1277 = vmatpush1.msra.mxu0 0.0
    %1278 = vmatprep.subr.mxu0 0.0
    %1279 = vmatpush1.msra.mxu0 0.0
    %1280 = vmatprep.subr.mxu0 0.0
    %1281 = vmatpush1.msra.mxu0 0.0
    %1282 = vmatprep.subr.mxu0 0.0
    %1283 = vmatpush1.msra.mxu0 0.0
    %1284 = vmatprep.subr.mxu0 0.0
    %1285 = vmatpush1.msra.mxu0 0.0
    %1286 = vmatprep.subr.mxu0 0.0
    %1287 = vmatpush1.msra.mxu0 0.0
    %1288 = vmatprep.subr.mxu0 0.0
    %1289 = vmatpush1.msra.mxu0 0.0
    %1290 = vmatprep.subr.mxu0 0.0
    %1291 = vmatpush1.msra.mxu0 0.0
    %1292 = vmatprep.subr.mxu0 0.0
    %1293 = vmatpush1.msra.mxu0 0.0
    %1294 = vmatprep.subr.mxu0 0.0
    %1295 = vmatpush1.msra.mxu0 0.0
    %1296 = vmatprep.subr.mxu0 0.0
    %1297 = vmatpush1.msra.mxu0 0.0
    %1298 = vmatprep.subr.mxu0 0.0
    %1299 = vmatpush1.msra.mxu0 0.0
    %1300 = vmatprep.subr.mxu0 0.0
    %1301 = vmatpush1.msra.mxu0 0.0
    %1302 = vmatprep.subr.mxu0 0.0
    %1303 = vmatpush1.msra.mxu0 0.0
    %1304 = vmatprep.subr.mxu0 0.0
    %1305 = vmatpush1.msra.mxu0 0.0
    %1306 = vmatprep.mubr.f32.mxu0 0.0
    %1307 = vmatmul.mubr.f32.gmra.mrb[0].mxu0 %v1163
    %v1308 = vpop.f32.mrb[0].mxu0
    %v1309 = vadd.f32 0.0, %v1308
    %v1310 = vpop.f32.mrb[0].mxu0
    %v1311 = vadd.f32 0.0, %v1310
    %1312 = vdwg.mxu0
    %v1313 = vadd.f32 %v1167, %v1238
    %v1314 = vadd.f32 %v1168, %v1240
    %v1315 = vadd.f32 %v1169, %v1309
    %v1316 = vadd.f32 %v1170, %v1311
    %v1317 = vxor.u32 %v1313, 2147483648
    %v1318 = vmul.f32 %v1317, 1.442695
    %v1319 = vpow.pop %v1318
    %v1320 = vadd.f32 %v1319, 1.0
    %v1321 = vrcp.pop %v1320
    %v1322 = vmul.f32 1.0, %v1321
    %v1323 = vxor.u32 %v1314, 2147483648
    %v1324 = vmul.f32 %v1323, 1.442695
    %v1325 = vpow.pop %v1324
    %v1326 = vadd.f32 %v1325, 1.0
    %v1327 = vrcp.pop %v1326
    %v1328 = vmul.f32 1.0, %v1327
    %v1329 = vtanh.pop %v1315
    %v1330 = vxor.u32 %v1316, 2147483648
    %v1331 = vmul.f32 %v1330, 1.442695
    %v1332 = vpow.pop %v1331
    %v1333 = vadd.f32 %v1332, 1.0
    %v1334 = vrcp.pop %v1333
    %v1335 = vmul.f32 1.0, %v1334
    %v1336 = vmul.f32 %v1328, %v1161
    %v1337 = vmul.f32 %v1322, %v1329
    %v1338 = vadd.f32 %v1336, %v1337
    %v1339 = vtanh.pop %v1338
    %v1340 = vmul.f32 %v1335, %v1339
    %s1341 = scalar_lea.vmem [#allocation11], 32
    %1342 = vst [vmem:[%s1341] sm:$0xff] %v1340
    %s1343 = scalar_lea.vmem [#allocation4], 160
    %v1344 = vld [vmem:[%s1343] sm:$0xff]
    %v1345 = vld [vmem:[%s1343 + $0x8] sm:$0xff]
    %v1346 = vld [vmem:[%s1343 + $0x10] sm:$0xff]
    %v1347 = vld [vmem:[%s1343 + $0x18] sm:$0xff]
    %1348 = vmatprep.subr.mxu0 %v395
    %1349 = vmatpush1.msra.mxu0 %v394
    %1350 = vmatprep.subr.mxu0 %v399
    %1351 = vmatpush1.msra.mxu0 %v398
    %1352 = vmatprep.subr.mxu0 %v403
    %1353 = vmatpush1.msra.mxu0 %v402
    %1354 = vmatprep.subr.mxu0 %v407
    %1355 = vmatpush1.msra.mxu0 %v406
    %1356 = vmatprep.subr.mxu0 %v411
    %1357 = vmatpush1.msra.mxu0 %v410
    %1358 = vmatprep.subr.mxu0 %v415
    %1359 = vmatpush1.msra.mxu0 %v414
    %1360 = vmatprep.subr.mxu0 %v419
    %1361 = vmatpush1.msra.mxu0 %v418
    %1362 = vmatprep.subr.mxu0 %v423
    %1363 = vmatpush1.msra.mxu0 %v422
    %1364 = vmatprep.subr.mxu0 %v427
    %1365 = vmatpush1.msra.mxu0 %v426
    %1366 = vmatprep.subr.mxu0 %v431
    %1367 = vmatpush1.msra.mxu0 %v430
    %1368 = vmatprep.subr.mxu0 %v435
    %1369 = vmatpush1.msra.mxu0 %v434
    %1370 = vmatprep.subr.mxu0 %v439
    %1371 = vmatpush1.msra.mxu0 %v438
    %1372 = vmatprep.subr.mxu0 %v443
    %1373 = vmatpush1.msra.mxu0 %v442
    %1374 = vmatprep.subr.mxu0 %v447
    %1375 = vmatpush1.msra.mxu0 %v446
    %1376 = vmatprep.subr.mxu0 %v451
    %1377 = vmatpush1.msra.mxu0 %v450
    %1378 = vmatprep.subr.mxu0 %v455
    %1379 = vmatpush1.msra.mxu0 %v454
    %1380 = vmatprep.subr.mxu0 0.0
    %1381 = vmatpush1.msra.mxu0 0.0
    %1382 = vmatprep.subr.mxu0 0.0
    %1383 = vmatpush1.msra.mxu0 0.0
    %1384 = vmatprep.subr.mxu0 0.0
    %1385 = vmatpush1.msra.mxu0 0.0
    %1386 = vmatprep.subr.mxu0 0.0
    %1387 = vmatpush1.msra.mxu0 0.0
    %1388 = vmatprep.subr.mxu0 0.0
    %1389 = vmatpush1.msra.mxu0 0.0
    %1390 = vmatprep.subr.mxu0 0.0
    %1391 = vmatpush1.msra.mxu0 0.0
    %1392 = vmatprep.subr.mxu0 0.0
    %1393 = vmatpush1.msra.mxu0 0.0
    %1394 = vmatprep.subr.mxu0 0.0
    %1395 = vmatpush1.msra.mxu0 0.0
    %1396 = vmatprep.subr.mxu0 0.0
    %1397 = vmatpush1.msra.mxu0 0.0
    %1398 = vmatprep.subr.mxu0 0.0
    %1399 = vmatpush1.msra.mxu0 0.0
    %1400 = vmatprep.subr.mxu0 0.0
    %1401 = vmatpush1.msra.mxu0 0.0
    %1402 = vmatprep.subr.mxu0 0.0
    %1403 = vmatpush1.msra.mxu0 0.0
    %1404 = vmatprep.subr.mxu0 0.0
    %1405 = vmatpush1.msra.mxu0 0.0
    %1406 = vmatprep.subr.mxu0 0.0
    %1407 = vmatpush1.msra.mxu0 0.0
    %1408 = vmatprep.subr.mxu0 0.0
    %1409 = vmatpush1.msra.mxu0 0.0
    %1410 = vmatprep.subr.mxu0 0.0
    %1411 = vmatpush1.msra.mxu0 0.0
    %1412 = vmatprep.mubr.f32.mxu0 0.0
    %1413 = vmatmul.mubr.f32.gmra.mrb[0].mxu0 %v1340
    %v1414 = vpop.f32.mrb[0].mxu0
    %v1415 = vadd.f32 0.0, %v1414
    %v1416 = vpop.f32.mrb[0].mxu0
    %v1417 = vadd.f32 0.0, %v1416
    %1418 = vdwg.mxu0
    %1419 = vmatprep.subr.mxu0 %v397
    %1420 = vmatpush1.msra.mxu0 %v396
    %1421 = vmatprep.subr.mxu0 %v401
    %1422 = vmatpush1.msra.mxu0 %v400
    %1423 = vmatprep.subr.mxu0 %v405
    %1424 = vmatpush1.msra.mxu0 %v404
    %1425 = vmatprep.subr.mxu0 %v409
    %1426 = vmatpush1.msra.mxu0 %v408
    %1427 = vmatprep.subr.mxu0 %v413
    %1428 = vmatpush1.msra.mxu0 %v412
    %1429 = vmatprep.subr.mxu0 %v417
    %1430 = vmatpush1.msra.mxu0 %v416
    %1431 = vmatprep.subr.mxu0 %v421
    %1432 = vmatpush1.msra.mxu0 %v420
    %1433 = vmatprep.subr.mxu0 %v425
    %1434 = vmatpush1.msra.mxu0 %v424
    %1435 = vmatprep.subr.mxu0 %v429
    %1436 = vmatpush1.msra.mxu0 %v428
    %1437 = vmatprep.subr.mxu0 %v433
    %1438 = vmatpush1.msra.mxu0 %v432
    %1439 = vmatprep.subr.mxu0 %v437
    %1440 = vmatpush1.msra.mxu0 %v436
    %1441 = vmatprep.subr.mxu0 %v441
    %1442 = vmatpush1.msra.mxu0 %v440
    %1443 = vmatprep.subr.mxu0 %v445
    %1444 = vmatpush1.msra.mxu0 %v444
    %1445 = vmatprep.subr.mxu0 %v449
    %1446 = vmatpush1.msra.mxu0 %v448
    %1447 = vmatprep.subr.mxu0 %v453
    %1448 = vmatpush1.msra.mxu0 %v452
    %1449 = vmatprep.subr.mxu0 %v457
    %1450 = vmatpush1.msra.mxu0 %v456
    %1451 = vmatprep.subr.mxu0 0.0
    %1452 = vmatpush1.msra.mxu0 0.0
    %1453 = vmatprep.subr.mxu0 0.0
    %1454 = vmatpush1.msra.mxu0 0.0
    %1455 = vmatprep.subr.mxu0 0.0
    %1456 = vmatpush1.msra.mxu0 0.0
    %1457 = vmatprep.subr.mxu0 0.0
    %1458 = vmatpush1.msra.mxu0 0.0
    %1459 = vmatprep.subr.mxu0 0.0
    %1460 = vmatpush1.msra.mxu0 0.0
    %1461 = vmatprep.subr.mxu0 0.0
    %1462 = vmatpush1.msra.mxu0 0.0
    %1463 = vmatprep.subr.mxu0 0.0
    %1464 = vmatpush1.msra.mxu0 0.0
    %1465 = vmatprep.subr.mxu0 0.0
    %1466 = vmatpush1.msra.mxu0 0.0
    %1467 = vmatprep.subr.mxu0 0.0
    %1468 = vmatpush1.msra.mxu0 0.0
    %1469 = vmatprep.subr.mxu0 0.0
    %1470 = vmatpush1.msra.mxu0 0.0
    %1471 = vmatprep.subr.mxu0 0.0
    %1472 = vmatpush1.msra.mxu0 0.0
    %1473 = vmatprep.subr.mxu0 0.0
    %1474 = vmatpush1.msra.mxu0 0.0
    %1475 = vmatprep.subr.mxu0 0.0
    %1476 = vmatpush1.msra.mxu0 0.0
    %1477 = vmatprep.subr.mxu0 0.0
    %1478 = vmatpush1.msra.mxu0 0.0
    %1479 = vmatprep.subr.mxu0 0.0
    %1480 = vmatpush1.msra.mxu0 0.0
    %1481 = vmatprep.subr.mxu0 0.0
    %1482 = vmatpush1.msra.mxu0 0.0
    %1483 = vmatprep.mubr.f32.mxu0 0.0
    %1484 = vmatmul.mubr.f32.gmra.mrb[0].mxu0 %v1340
    %v1485 = vpop.f32.mrb[0].mxu0
    %v1486 = vadd.f32 0.0, %v1485
    %v1487 = vpop.f32.mrb[0].mxu0
    %v1488 = vadd.f32 0.0, %v1487
    %1489 = vdwg.mxu0
    %v1490 = vadd.f32 %v1344, %v1415
    %v1491 = vadd.f32 %v1345, %v1417
    %v1492 = vadd.f32 %v1346, %v1486
    %v1493 = vadd.f32 %v1347, %v1488
    %v1494 = vxor.u32 %v1490, 2147483648
    %v1495 = vmul.f32 %v1494, 1.442695
    %v1496 = vpow.pop %v1495
    %v1497 = vadd.f32 %v1496, 1.0
    %v1498 = vrcp.pop %v1497
    %v1499 = vmul.f32 1.0, %v1498
    %v1500 = vxor.u32 %v1491, 2147483648
    %v1501 = vmul.f32 %v1500, 1.442695
    %v1502 = vpow.pop %v1501
    %v1503 = vadd.f32 %v1502, 1.0
    %v1504 = vrcp.pop %v1503
    %v1505 = vmul.f32 1.0, %v1504
    %v1506 = vtanh.pop %v1492
    %v1507 = vxor.u32 %v1493, 2147483648
    %v1508 = vmul.f32 %v1507, 1.442695
    %v1509 = vpow.pop %v1508
    %v1510 = vadd.f32 %v1509, 1.0
    %v1511 = vrcp.pop %v1510
    %v1512 = vmul.f32 1.0, %v1511
    %v1513 = vmul.f32 %v1505, %v1338
    %v1514 = vmul.f32 %v1499, %v1506
    %v1515 = vadd.f32 %v1513, %v1514
    %v1516 = vtanh.pop %v1515
    %v1517 = vmul.f32 %v1512, %v1516
    %s1518 = scalar_lea.vmem [#allocation11], 40
    %1519 = vst [vmem:[%s1518] sm:$0xff] %v1517
    %s1520 = scalar_lea.vmem [#allocation4], 192
    %v1521 = vld [vmem:[%s1520] sm:$0xff]
    %v1522 = vld [vmem:[%s1520 + $0x8] sm:$0xff]
    %v1523 = vld [vmem:[%s1520 + $0x10] sm:$0xff]
    %v1524 = vld [vmem:[%s1520 + $0x18] sm:$0xff]
    %1525 = vmatprep.subr.mxu0 %v395
    %1526 = vmatpush1.msra.mxu0 %v394
    %1527 = vmatprep.subr.mxu0 %v399
    %1528 = vmatpush1.msra.mxu0 %v398
    %1529 = vmatprep.subr.mxu0 %v403
    %1530 = vmatpush1.msra.mxu0 %v402
    %1531 = vmatprep.subr.mxu0 %v407
    %1532 = vmatpush1.msra.mxu0 %v406
    %1533 = vmatprep.subr.mxu0 %v411
    %1534 = vmatpush1.msra.mxu0 %v410
    %1535 = vmatprep.subr.mxu0 %v415
    %1536 = vmatpush1.msra.mxu0 %v414
    %1537 = vmatprep.subr.mxu0 %v419
    %1538 = vmatpush1.msra.mxu0 %v418
    %1539 = vmatprep.subr.mxu0 %v423
    %1540 = vmatpush1.msra.mxu0 %v422
    %1541 = vmatprep.subr.mxu0 %v427
    %1542 = vmatpush1.msra.mxu0 %v426
    %1543 = vmatprep.subr.mxu0 %v431
    %1544 = vmatpush1.msra.mxu0 %v430
    %1545 = vmatprep.subr.mxu0 %v435
    %1546 = vmatpush1.msra.mxu0 %v434
    %1547 = vmatprep.subr.mxu0 %v439
    %1548 = vmatpush1.msra.mxu0 %v438
    %1549 = vmatprep.subr.mxu0 %v443
    %1550 = vmatpush1.msra.mxu0 %v442
    %1551 = vmatprep.subr.mxu0 %v447
    %1552 = vmatpush1.msra.mxu0 %v446
    %1553 = vmatprep.subr.mxu0 %v451
    %1554 = vmatpush1.msra.mxu0 %v450
    %1555 = vmatprep.subr.mxu0 %v455
    %1556 = vmatpush1.msra.mxu0 %v454
    %1557 = vmatprep.subr.mxu0 0.0
    %1558 = vmatpush1.msra.mxu0 0.0
    %1559 = vmatprep.subr.mxu0 0.0
    %1560 = vmatpush1.msra.mxu0 0.0
    %1561 = vmatprep.subr.mxu0 0.0
    %1562 = vmatpush1.msra.mxu0 0.0
    %1563 = vmatprep.subr.mxu0 0.0
    %1564 = vmatpush1.msra.mxu0 0.0
    %1565 = vmatprep.subr.mxu0 0.0
    %1566 = vmatpush1.msra.mxu0 0.0
    %1567 = vmatprep.subr.mxu0 0.0
    %1568 = vmatpush1.msra.mxu0 0.0
    %1569 = vmatprep.subr.mxu0 0.0
    %1570 = vmatpush1.msra.mxu0 0.0
    %1571 = vmatprep.subr.mxu0 0.0
    %1572 = vmatpush1.msra.mxu0 0.0
    %1573 = vmatprep.subr.mxu0 0.0
    %1574 = vmatpush1.msra.mxu0 0.0
    %1575 = vmatprep.subr.mxu0 0.0
    %1576 = vmatpush1.msra.mxu0 0.0
    %1577 = vmatprep.subr.mxu0 0.0
    %1578 = vmatpush1.msra.mxu0 0.0
    %1579 = vmatprep.subr.mxu0 0.0
    %1580 = vmatpush1.msra.mxu0 0.0
    %1581 = vmatprep.subr.mxu0 0.0
    %1582 = vmatpush1.msra.mxu0 0.0
    %1583 = vmatprep.subr.mxu0 0.0
    %1584 = vmatpush1.msra.mxu0 0.0
    %1585 = vmatprep.subr.mxu0 0.0
    %1586 = vmatpush1.msra.mxu0 0.0
    %1587 = vmatprep.subr.mxu0 0.0
    %1588 = vmatpush1.msra.mxu0 0.0
    %1589 = vmatprep.mubr.f32.mxu0 0.0
    %1590 = vmatmul.mubr.f32.gmra.mrb[0].mxu0 %v1517
    %v1591 = vpop.f32.mrb[0].mxu0
    %v1592 = vadd.f32 0.0, %v1591
    %v1593 = vpop.f32.mrb[0].mxu0
    %v1594 = vadd.f32 0.0, %v1593
    %1595 = vdwg.mxu0
    %1596 = vmatprep.subr.mxu0 %v397
    %1597 = vmatpush1.msra.mxu0 %v396
    %1598 = vmatprep.subr.mxu0 %v401
    %1599 = vmatpush1.msra.mxu0 %v400
    %1600 = vmatprep.subr.mxu0 %v405
    %1601 = vmatpush1.msra.mxu0 %v404
    %1602 = vmatprep.subr.mxu0 %v409
    %1603 = vmatpush1.msra.mxu0 %v408
    %1604 = vmatprep.subr.mxu0 %v413
    %1605 = vmatpush1.msra.mxu0 %v412
    %1606 = vmatprep.subr.mxu0 %v417
    %1607 = vmatpush1.msra.mxu0 %v416
    %1608 = vmatprep.subr.mxu0 %v421
    %1609 = vmatpush1.msra.mxu0 %v420
    %1610 = vmatprep.subr.mxu0 %v425
    %1611 = vmatpush1.msra.mxu0 %v424
    %1612 = vmatprep.subr.mxu0 %v429
    %1613 = vmatpush1.msra.mxu0 %v428
    %1614 = vmatprep.subr.mxu0 %v433
    %1615 = vmatpush1.msra.mxu0 %v432
    %1616 = vmatprep.subr.mxu0 %v437
    %1617 = vmatpush1.msra.mxu0 %v436
    %1618 = vmatprep.subr.mxu0 %v441
    %1619 = vmatpush1.msra.mxu0 %v440
    %1620 = vmatprep.subr.mxu0 %v445
    %1621 = vmatpush1.msra.mxu0 %v444
    %1622 = vmatprep.subr.mxu0 %v449
    %1623 = vmatpush1.msra.mxu0 %v448
    %1624 = vmatprep.subr.mxu0 %v453
    %1625 = vmatpush1.msra.mxu0 %v452
    %1626 = vmatprep.subr.mxu0 %v457
    %1627 = vmatpush1.msra.mxu0 %v456
    %1628 = vmatprep.subr.mxu0 0.0
    %1629 = vmatpush1.msra.mxu0 0.0
    %1630 = vmatprep.subr.mxu0 0.0
    %1631 = vmatpush1.msra.mxu0 0.0
    %1632 = vmatprep.subr.mxu0 0.0
    %1633 = vmatpush1.msra.mxu0 0.0
    %1634 = vmatprep.subr.mxu0 0.0
    %1635 = vmatpush1.msra.mxu0 0.0
    %1636 = vmatprep.subr.mxu0 0.0
    %1637 = vmatpush1.msra.mxu0 0.0
    %1638 = vmatprep.subr.mxu0 0.0
    %1639 = vmatpush1.msra.mxu0 0.0
    %1640 = vmatprep.subr.mxu0 0.0
    %1641 = vmatpush1.msra.mxu0 0.0
    %1642 = vmatprep.subr.mxu0 0.0
    %1643 = vmatpush1.msra.mxu0 0.0
    %1644 = vmatprep.subr.mxu0 0.0
    %1645 = vmatpush1.msra.mxu0 0.0
    %1646 = vmatprep.subr.mxu0 0.0
    %1647 = vmatpush1.msra.mxu0 0.0
    %1648 = vmatprep.subr.mxu0 0.0
    %1649 = vmatpush1.msra.mxu0 0.0
    %1650 = vmatprep.subr.mxu0 0.0
    %1651 = vmatpush1.msra.mxu0 0.0
    %1652 = vmatprep.subr.mxu0 0.0
    %1653 = vmatpush1.msra.mxu0 0.0
    %1654 = vmatprep.subr.mxu0 0.0
    %1655 = vmatpush1.msra.mxu0 0.0
    %1656 = vmatprep.subr.mxu0 0.0
    %1657 = vmatpush1.msra.mxu0 0.0
    %1658 = vmatprep.subr.mxu0 0.0
    %1659 = vmatpush1.msra.mxu0 0.0
    %1660 = vmatprep.mubr.f32.mxu0 0.0
    %1661 = vmatmul.mubr.f32.gmra.mrb[0].mxu0 %v1517
    %v1662 = vpop.f32.mrb[0].mxu0
    %v1663 = vadd.f32 0.0, %v1662
    %v1664 = vpop.f32.mrb[0].mxu0
    %v1665 = vadd.f32 0.0, %v1664
    %1666 = vdwg.mxu0
    %v1667 = vadd.f32 %v1521, %v1592
    %v1668 = vadd.f32 %v1522, %v1594
    %v1669 = vadd.f32 %v1523, %v1663
    %v1670 = vadd.f32 %v1524, %v1665
    %v1671 = vxor.u32 %v1667, 2147483648
    %v1672 = vmul.f32 %v1671, 1.442695
    %v1673 = vpow.pop %v1672
    %v1674 = vadd.f32 %v1673, 1.0
    %v1675 = vrcp.pop %v1674
    %v1676 = vmul.f32 1.0, %v1675
    %v1677 = vxor.u32 %v1668, 2147483648
    %v1678 = vmul.f32 %v1677, 1.442695
    %v1679 = vpow.pop %v1678
    %v1680 = vadd.f32 %v1679, 1.0
    %v1681 = vrcp.pop %v1680
    %v1682 = vmul.f32 1.0, %v1681
    %v1683 = vtanh.pop %v1669
    %v1684 = vxor.u32 %v1670, 2147483648
    %v1685 = vmul.f32 %v1684, 1.442695
    %v1686 = vpow.pop %v1685
    %v1687 = vadd.f32 %v1686, 1.0
    %v1688 = vrcp.pop %v1687
    %v1689 = vmul.f32 1.0, %v1688
    %v1690 = vmul.f32 %v1682, %v1515
    %v1691 = vmul.f32 %v1676, %v1683
    %v1692 = vadd.f32 %v1690, %v1691
    %v1693 = vtanh.pop %v1692
    %v1694 = vmul.f32 %v1689, %v1693
    %s1695 = scalar_lea.vmem [#allocation11], 48
    %1696 = vst [vmem:[%s1695] sm:$0xff] %v1694
    %s1697 = scalar_lea.vmem [#allocation4], 224
    %v1698 = vld [vmem:[%s1697] sm:$0xff]
    %v1699 = vld [vmem:[%s1697 + $0x8] sm:$0xff]
    %v1700 = vld [vmem:[%s1697 + $0x10] sm:$0xff]
    %v1701 = vld [vmem:[%s1697 + $0x18] sm:$0xff]
    %1702 = vmatprep.subr.mxu0 %v395
    %1703 = vmatpush1.msra.mxu0 %v394
    %1704 = vmatprep.subr.mxu0 %v399
    %1705 = vmatpush1.msra.mxu0 %v398
    %1706 = vmatprep.subr.mxu0 %v403
    %1707 = vmatpush1.msra.mxu0 %v402
    %1708 = vmatprep.subr.mxu0 %v407
    %1709 = vmatpush1.msra.mxu0 %v406
    %1710 = vmatprep.subr.mxu0 %v411
    %1711 = vmatpush1.msra.mxu0 %v410
    %1712 = vmatprep.subr.mxu0 %v415
    %1713 = vmatpush1.msra.mxu0 %v414
    %1714 = vmatprep.subr.mxu0 %v419
    %1715 = vmatpush1.msra.mxu0 %v418
    %1716 = vmatprep.subr.mxu0 %v423
    %1717 = vmatpush1.msra.mxu0 %v422
    %1718 = vmatprep.subr.mxu0 %v427
    %1719 = vmatpush1.msra.mxu0 %v426
    %1720 = vmatprep.subr.mxu0 %v431
    %1721 = vmatpush1.msra.mxu0 %v430
    %1722 = vmatprep.subr.mxu0 %v435
    %1723 = vmatpush1.msra.mxu0 %v434
    %1724 = vmatprep.subr.mxu0 %v439
    %1725 = vmatpush1.msra.mxu0 %v438
    %1726 = vmatprep.subr.mxu0 %v443
    %1727 = vmatpush1.msra.mxu0 %v442
    %1728 = vmatprep.subr.mxu0 %v447
    %1729 = vmatpush1.msra.mxu0 %v446
    %1730 = vmatprep.subr.mxu0 %v451
    %1731 = vmatpush1.msra.mxu0 %v450
    %1732 = vmatprep.subr.mxu0 %v455
    %1733 = vmatpush1.msra.mxu0 %v454
    %1734 = vmatprep.subr.mxu0 0.0
    %1735 = vmatpush1.msra.mxu0 0.0
    %1736 = vmatprep.subr.mxu0 0.0
    %1737 = vmatpush1.msra.mxu0 0.0
    %1738 = vmatprep.subr.mxu0 0.0
    %1739 = vmatpush1.msra.mxu0 0.0
    %1740 = vmatprep.subr.mxu0 0.0
    %1741 = vmatpush1.msra.mxu0 0.0
    %1742 = vmatprep.subr.mxu0 0.0
    %1743 = vmatpush1.msra.mxu0 0.0
    %1744 = vmatprep.subr.mxu0 0.0
    %1745 = vmatpush1.msra.mxu0 0.0
    %1746 = vmatprep.subr.mxu0 0.0
    %1747 = vmatpush1.msra.mxu0 0.0
    %1748 = vmatprep.subr.mxu0 0.0
    %1749 = vmatpush1.msra.mxu0 0.0
    %1750 = vmatprep.subr.mxu0 0.0
    %1751 = vmatpush1.msra.mxu0 0.0
    %1752 = vmatprep.subr.mxu0 0.0
    %1753 = vmatpush1.msra.mxu0 0.0
    %1754 = vmatprep.subr.mxu0 0.0
    %1755 = vmatpush1.msra.mxu0 0.0
    %1756 = vmatprep.subr.mxu0 0.0
    %1757 = vmatpush1.msra.mxu0 0.0
    %1758 = vmatprep.subr.mxu0 0.0
    %1759 = vmatpush1.msra.mxu0 0.0
    %1760 = vmatprep.subr.mxu0 0.0
    %1761 = vmatpush1.msra.mxu0 0.0
    %1762 = vmatprep.subr.mxu0 0.0
    %1763 = vmatpush1.msra.mxu0 0.0
    %1764 = vmatprep.subr.mxu0 0.0
    %1765 = vmatpush1.msra.mxu0 0.0
    %1766 = vmatprep.mubr.f32.mxu0 0.0
    %1767 = vmatmul.mubr.f32.gmra.mrb[0].mxu0 %v1694
    %v1768 = vpop.f32.mrb[0].mxu0
    %v1769 = vadd.f32 0.0, %v1768
    %v1770 = vpop.f32.mrb[0].mxu0
    %v1771 = vadd.f32 0.0, %v1770
    %1772 = vdwg.mxu0
    %1773 = vmatprep.subr.mxu0 %v397
    %1774 = vmatpush1.msra.mxu0 %v396
    %1775 = vmatprep.subr.mxu0 %v401
    %1776 = vmatpush1.msra.mxu0 %v400
    %1777 = vmatprep.subr.mxu0 %v405
    %1778 = vmatpush1.msra.mxu0 %v404
    %1779 = vmatprep.subr.mxu0 %v409
    %1780 = vmatpush1.msra.mxu0 %v408
    %1781 = vmatprep.subr.mxu0 %v413
    %1782 = vmatpush1.msra.mxu0 %v412
    %1783 = vmatprep.subr.mxu0 %v417
    %1784 = vmatpush1.msra.mxu0 %v416
    %1785 = vmatprep.subr.mxu0 %v421
    %1786 = vmatpush1.msra.mxu0 %v420
    %1787 = vmatprep.subr.mxu0 %v425
    %1788 = vmatpush1.msra.mxu0 %v424
    %1789 = vmatprep.subr.mxu0 %v429
    %1790 = vmatpush1.msra.mxu0 %v428
    %1791 = vmatprep.subr.mxu0 %v433
    %1792 = vmatpush1.msra.mxu0 %v432
    %1793 = vmatprep.subr.mxu0 %v437
    %1794 = vmatpush1.msra.mxu0 %v436
    %1795 = vmatprep.subr.mxu0 %v441
    %1796 = vmatpush1.msra.mxu0 %v440
    %1797 = vmatprep.subr.mxu0 %v445
    %1798 = vmatpush1.msra.mxu0 %v444
    %1799 = vmatprep.subr.mxu0 %v449
    %1800 = vmatpush1.msra.mxu0 %v448
    %1801 = vmatprep.subr.mxu0 %v453
    %1802 = vmatpush1.msra.mxu0 %v452
    %1803 = vmatprep.subr.mxu0 %v457
    %1804 = vmatpush1.msra.mxu0 %v456
    %1805 = vmatprep.subr.mxu0 0.0
    %1806 = vmatpush1.msra.mxu0 0.0
    %1807 = vmatprep.subr.mxu0 0.0
    %1808 = vmatpush1.msra.mxu0 0.0
    %1809 = vmatprep.subr.mxu0 0.0
    %1810 = vmatpush1.msra.mxu0 0.0
    %1811 = vmatprep.subr.mxu0 0.0
    %1812 = vmatpush1.msra.mxu0 0.0
    %1813 = vmatprep.subr.mxu0 0.0
    %1814 = vmatpush1.msra.mxu0 0.0
    %1815 = vmatprep.subr.mxu0 0.0
    %1816 = vmatpush1.msra.mxu0 0.0
    %1817 = vmatprep.subr.mxu0 0.0
    %1818 = vmatpush1.msra.mxu0 0.0
    %1819 = vmatprep.subr.mxu0 0.0
    %1820 = vmatpush1.msra.mxu0 0.0
    %1821 = vmatprep.subr.mxu0 0.0
    %1822 = vmatpush1.msra.mxu0 0.0
    %1823 = vmatprep.subr.mxu0 0.0
    %1824 = vmatpush1.msra.mxu0 0.0
    %1825 = vmatprep.subr.mxu0 0.0
    %1826 = vmatpush1.msra.mxu0 0.0
    %1827 = vmatprep.subr.mxu0 0.0
    %1828 = vmatpush1.msra.mxu0 0.0
    %1829 = vmatprep.subr.mxu0 0.0
    %1830 = vmatpush1.msra.mxu0 0.0
    %1831 = vmatprep.subr.mxu0 0.0
    %1832 = vmatpush1.msra.mxu0 0.0
    %1833 = vmatprep.subr.mxu0 0.0
    %1834 = vmatpush1.msra.mxu0 0.0
    %1835 = vmatprep.subr.mxu0 0.0
    %1836 = vmatpush1.msra.mxu0 0.0
    %1837 = vmatprep.mubr.f32.mxu0 0.0
    %1838 = vmatmul.mubr.f32.gmra.mrb[0].mxu0 %v1694
    %v1839 = vpop.f32.mrb[0].mxu0
    %v1840 = vadd.f32 0.0, %v1839
    %v1841 = vpop.f32.mrb[0].mxu0
    %v1842 = vadd.f32 0.0, %v1841
    %1843 = vdwg.mxu0
    %v1844 = vadd.f32 %v1698, %v1769
    %v1845 = vadd.f32 %v1699, %v1771
    %v1846 = vadd.f32 %v1700, %v1840
    %v1847 = vadd.f32 %v1701, %v1842
    %v1848 = vxor.u32 %v1844, 2147483648
    %v1849 = vmul.f32 %v1848, 1.442695
    %v1850 = vpow.pop %v1849
    %v1851 = vadd.f32 %v1850, 1.0
    %v1852 = vrcp.pop %v1851
    %v1853 = vmul.f32 1.0, %v1852
    %v1854 = vxor.u32 %v1845, 2147483648
    %v1855 = vmul.f32 %v1854, 1.442695
    %v1856 = vpow.pop %v1855
    %v1857 = vadd.f32 %v1856, 1.0
    %v1858 = vrcp.pop %v1857
    %v1859 = vmul.f32 1.0, %v1858
    %v1860 = vtanh.pop %v1846
    %v1861 = vxor.u32 %v1847, 2147483648
    %v1862 = vmul.f32 %v1861, 1.442695
    %v1863 = vpow.pop %v1862
    %v1864 = vadd.f32 %v1863, 1.0
    %v1865 = vrcp.pop %v1864
    %v1866 = vmul.f32 1.0, %v1865
    %v1867 = vmul.f32 %v1859, %v1692
    %v1868 = vmul.f32 %v1853, %v1860
    %v1869 = vadd.f32 %v1867, %v1868
    %v1870 = vtanh.pop %v1869
    %v1871 = vmul.f32 %v1866, %v1870
    %s1872 = scalar_lea.vmem [#allocation11], 56
    %1873 = vst [vmem:[%s1872] sm:$0xff] %v1871
    %1874 = vst [vmem:[#allocation2] sm:$0xff] %v1871
    %1875 = vst [vmem:[#allocation3] sm:$0xff] %v1869
    // Predicated region
    $region34: #{tpu_custom_call.1} parent=1 // pred_check
      _
    $region35: #{tpu_custom_call.1} parent=1 // pred_check_branch
      %1877 = sbr.rel (0) target = $region37
    $region36: #{tpu_custom_call.1} parent=1 // pred_region
      %s1879 = ssub.s32 1024, 1024
      %1880 = vsyncadd [#allocation7], %s1879
      %s1881 = sshll.u32 [#allocation11], 4
      %s1882 = int_to_ptr.vmem [resolvable:$true] %s1881
      %1887 = dma.vmem_to_hbm [thread:$0]  %s1882, 1024, %s4, [#allocation7], 128, 128, 8
    $region37: #{tpu_custom_call.1} parent=1 // pred_fallthru
      _
    // Predicated region
    $region38: #{tpu_custom_call.1} parent=1 // pred_check
      _
    $region39: #{tpu_custom_call.1} parent=1 // pred_check_branch
      %1889 = sbr.rel (0) target = $region41
    $region40: #{tpu_custom_call.1} parent=1 // pred_region
      %1890 = dma.done [#allocation7], 1024
    $region41: #{tpu_custom_call.1} parent=1 // pred_fallthru
      _
    %1891 = vsyncpa [#allocation6], 1
    %1892 = vsyncpa [#allocation9], 1
    %1893 = vsyncpa [#allocation7], 1

</llo_original>
